<compile_context>
chip_gen: v6e
topology: v6e:2x2x1
jax: 0.10.0
libtpu: 0.0.40
codegen_flags: <defaults>
</compile_context>

<pallas_src>
import functools

import numpy as np
import jax
import jax.numpy as jnp
from jax.experimental import pallas as pl
from jax.experimental.pallas import tpu as pltpu


# ----------------------------------------------------------------------------
# Fused basicConv kernel
# ----------------------------------------------------------------------------
def _basic_conv_kernel(x_ref, w1_ref, b1_ref, w2_ref, b2_ref, o_ref,
                       xpad_ref, tpad_ref, *, H, W, C, TH):
    # x_ref   : (1, H, W, C)     full input frame (resident across row tiles)
    # w?_ref  : (9*C, C)         im2col-folded 3x3 weights
    # b?_ref  : (1, C)
    # o_ref   : (1, TH, W, C)    output row tile
    # xpad_ref: (H+4, W+2, C)    zero-padded input frame (filled once / batch)
    # tpad_ref: (TH+2, W+2, C)   width-padded conv1 activation for this tile
    t = pl.program_id(1)
    r0 = pl.multiple_of(t * TH, TH)

    # Build the zero-padded input frame once per batch element (the row-tile
    # grid axis is sequential, the scratch persists across it).
    @pl.when(t == 0)
    def _():
        xpad_ref[...] = jnp.zeros_like(xpad_ref)
        tpad_ref[...] = jnp.zeros_like(tpad_ref)
        xpad_ref[2:H + 2, 1:W + 1, :] = x_ref[0]

    # ---- conv1 + bias + ReLU over the TH+2 halo rows: single K=9C matmul ---
    xwin = xpad_ref[pl.ds(r0, TH + 4), :, :]          # frame rows r0-2 .. r0+TH+1
    cols1 = jnp.concatenate(
        [xwin[dy:dy + TH + 2, dx:dx + W, :]
         for dy in range(3) for dx in range(3)], axis=-1)      # (TH+2, W, 9C)
    t1 = jnp.dot(cols1.reshape((TH + 2) * W, 9 * C), w1_ref[...],
                 preferred_element_type=jnp.float32)
    t1 = jnp.maximum(t1 + b1_ref[...], 0.0).reshape(TH + 2, W, C)
    tpad_ref[:, 1:W + 1, :] = t1                      # width borders stay zero

    # conv2 must see PyTorch's zero padding of the conv1 output at the frame
    # borders (not conv1 evaluated over the pad region) -> zero the halo rows
    # that fall outside the frame.
    @pl.when(r0 == 0)
    def _():
        tpad_ref[0, :, :] = jnp.zeros((W + 2, C), jnp.float32)

    @pl.when(r0 + TH == H)
    def _():
        tpad_ref[TH + 1, :, :] = jnp.zeros((W + 2, C), jnp.float32)

    # ---- conv2 + bias + ReLU + residual add: single K=9C matmul ------------
    cols2 = jnp.concatenate(
        [tpad_ref[dy:dy + TH, dx:dx + W, :]
         for dy in range(3) for dx in range(3)], axis=-1)      # (TH, W, 9C)
    y = jnp.dot(cols2.reshape(TH * W, 9 * C), w2_ref[...],
                preferred_element_type=jnp.float32)
    y = jnp.maximum(y + b2_ref[...], 0.0).reshape(TH, W, C)
    o_ref[0] = y + x_ref[0, pl.ds(r0, TH), :, :]


# ----------------------------------------------------------------------------
# Wrappers
# ----------------------------------------------------------------------------
def _pick_row_tile(H):
    """Largest row tile that divides H and still gives >= 2 grid steps."""
    for th in (128, 64, 32, 16, 8):
        if H % th == 0 and H // th >= 2:
            return th
    return H


def basic_conv_nhwc(x, w1, b1, w2, b2, *, row_tile=None):
    """Fused basicConv block on NHWC float32 input.

    x: (N, H, W, C); w1, w2: (3, 3, C, C) HWIO; b1, b2: (C,).
    """
    N, H, W, C = x.shape
    assert w1.shape == (3, 3, C, C) and w2.shape == (3, 3, C, C)

    # Pad channels up to a multiple of 8 (sublane friendliness). Padded weight
    # rows/columns and biases are zero, so real channels are unchanged and the
    # padded output channels are exactly zero (sliced off below).
    Cp = max(8, -(-C // 8) * 8)
    if Cp != C:
        pc = Cp - C
        x = jnp.pad(x, ((0, 0), (0, 0), (0, 0), (0, pc)))
        w1 = jnp.pad(w1, ((0, 0), (0, 0), (0, pc), (0, pc)))
        w2 = jnp.pad(w2, ((0, 0), (0, 0), (0, pc), (0, pc)))
        b1 = jnp.pad(b1, ((0, pc),))
        b2 = jnp.pad(b2, ((0, pc),))

    # Fold the 3x3 taps into the contraction dim: (3,3,Cin,Cout) -> (9*Cin,Cout)
    # (tap order matches the in-kernel concat: (dy*3 + dx)*Cin + cin).
    w1f = w1.astype(jnp.float32).reshape(9 * Cp, Cp)
    w2f = w2.astype(jnp.float32).reshape(9 * Cp, Cp)
    b1r = b1.astype(jnp.float32).reshape(1, Cp)
    b2r = b2.astype(jnp.float32).reshape(1, Cp)

    TH = row_tile if row_tile is not None else _pick_row_tile(H)
    assert H % TH == 0
    grid = (N, H // TH)

    kernel = functools.partial(_basic_conv_kernel, H=H, W=W, C=Cp, TH=TH)

    out = pl.pallas_call(
        kernel,
        out_shape=jax.ShapeDtypeStruct((N, H, W, Cp), jnp.float32),
        grid=grid,
        in_specs=[
            # Full frame of batch n; constant block index along the row-tile
            # axis keeps it resident in VMEM (fetched once per batch element).
            pl.BlockSpec((1, H, W, Cp), lambda n, t: (n, 0, 0, 0)),
            pl.BlockSpec((9 * Cp, Cp), lambda n, t: (0, 0)),
            pl.BlockSpec((1, Cp), lambda n, t: (0, 0)),
            pl.BlockSpec((9 * Cp, Cp), lambda n, t: (0, 0)),
            pl.BlockSpec((1, Cp), lambda n, t: (0, 0)),
        ],
        out_specs=pl.BlockSpec((1, TH, W, Cp), lambda n, t: (n, t, 0, 0)),
        scratch_shapes=[
            pltpu.VMEM((H + 4, W + 2, Cp), jnp.float32),   # padded input frame
            pltpu.VMEM((TH + 2, W + 2, Cp), jnp.float32),  # padded conv1 tile
        ],
        compiler_params=pltpu.CompilerParams(
            # Batch axis may be split across TensorCores; the row-tile axis is
            # sequential because the padded-frame scratch is filled at t == 0.
            dimension_semantics=("parallel", "arbitrary"),
            vmem_limit_bytes=32 * 1024 * 1024,
        ),
    )(x.astype(jnp.float32), w1f, b1r, w2f, b2r)

    return out[..., :C] if Cp != C else out


def basic_conv_nchw(x_nchw, w1, b1, w2, b2):
    """PyTorch-layout wrapper: NCHW in / NCHW out."""
    x = jnp.transpose(x_nchw.astype(jnp.float32), (0, 2, 3, 1))
    y = basic_conv_nhwc(x, w1, b1, w2, b2)
    return jnp.transpose(y, (0, 3, 1, 2))


# ----------------------------------------------------------------------------
# Pure-JAX reference (PyTorch semantics) for a correctness check
# ----------------------------------------------------------------------------
def _reference_nchw(x, w1, b1, w2, b2):
    def conv(v, w, b):
        y = jax.lax.conv_general_dilated(
            v, w, window_strides=(1, 1), padding=((1, 1), (1, 1)),
            dimension_numbers=('NCHW', 'HWIO', 'NCHW'),
            precision=jax.lax.Precision.HIGHEST)
        return y + b[None, :, None, None]

    t = jax.nn.relu(conv(x, w1, b1))
    return x + jax.nn.relu(conv(t, w2, b2))


# ----------------------------------------------------------------------------
if __name__ == "__main__":
    key = jax.random.PRNGKey(0)
    k_x, k_w1, k_b1, k_w2, k_b2 = jax.random.split(key, 5)

    # basicConv(in_channels=32) on a small frame: batch=2, C=32, 16x16 spatial.
    N, C, H, W = 2, 32, 16, 16
    bound = 1.0 / np.sqrt(9 * C)   # PyTorch Conv2d default init bound
    x = jax.random.normal(k_x, (N, C, H, W), jnp.float32)
    w1 = jax.random.uniform(k_w1, (3, 3, C, C), jnp.float32, -bound, bound)
    b1 = jax.random.uniform(k_b1, (C,), jnp.float32, -bound, bound)
    w2 = jax.random.uniform(k_w2, (3, 3, C, C), jnp.float32, -bound, bound)
    b2 = jax.random.uniform(k_b2, (C,), jnp.float32, -bound, bound)

    fwd = jax.jit(basic_conv_nchw)
    out = fwd(x, w1, b1, w2, b2)
    jax.block_until_ready(out)

    assert out.shape == (N, C, H, W)
    assert out.dtype == jnp.float32

    ref = _reference_nchw(x, w1, b1, w2, b2)
    err = float(jnp.max(jnp.abs(out - ref)))
    # Loose enough to tolerate reduced-precision f32 MXU passes, tight enough
    # to catch any padding / tap-ordering / residual bug (those are O(0.1+)).
    assert err < 5e-2, f"max abs err vs reference: {err}"

    print("KERNEL_OK")
</pallas_src>

<mosaic_0001>
module attributes {stable_mosaic.version = 11 : i64} {
  func.func @_basic_conv_kernel(%arg0: i32, %arg1: i32, %arg2: memref<1x16x16x32xf32, #tpu.memory_space<vmem>>, %arg3: memref<288x32xf32, #tpu.memory_space<vmem>>, %arg4: memref<1x32xf32, #tpu.memory_space<vmem>>, %arg5: memref<288x32xf32, #tpu.memory_space<vmem>>, %arg6: memref<1x32xf32, #tpu.memory_space<vmem>>, %arg7: memref<1x8x16x32xf32, #tpu.memory_space<vmem>>, %arg8: memref<20x18x32xf32, #tpu.memory_space<vmem>>, %arg9: memref<10x18x32xf32, #tpu.memory_space<vmem>>) attributes {dimension_semantics = [#tpu.dimension_semantics<parallel>, #tpu.dimension_semantics<arbitrary>], iteration_bounds = array<i64: 2, 2>, scalar_prefetch = 0 : i64, scratch_operands = 2 : i64, tpu.core_type = #tpu.core_type<tc>, window_params = [{transform_indices = @transform_0, window_bounds = array<i64: 1, 16, 16, 32>}, {pipeline_mode = #tpu.pipeline_mode<synchronous>, transform_indices = @transform_1, window_bounds = array<i64: 288, 32>}, {pipeline_mode = #tpu.pipeline_mode<synchronous>, transform_indices = @transform_2, window_bounds = array<i64: 1, 32>}, {pipeline_mode = #tpu.pipeline_mode<synchronous>, transform_indices = @transform_3, window_bounds = array<i64: 288, 32>}, {pipeline_mode = #tpu.pipeline_mode<synchronous>, transform_indices = @transform_4, window_bounds = array<i64: 1, 32>}, {transform_indices = @transform_5, window_bounds = array<i64: 1, 8, 16, 32>}]} {
    %c8_i32 = arith.constant 8 : i32
    %0 = arith.muli %arg1, %c8_i32 : i32
    %1 = tpu.assume_multiple %0, 8 : i32
    %c0_i32 = arith.constant 0 : i32
    %2 = arith.cmpi eq, %arg1, %c0_i32 : i32
    %3 = arith.extui %2 : i1 to i32
    %c0_i32_0 = arith.constant 0 : i32
    %4 = arith.cmpi ne, %3, %c0_i32_0 : i32
    scf.if %4 {
      %cst_52 = arith.constant 0.000000e+00 : f32
      %60 = vector.broadcast %cst_52 : f32 to vector<20x18x32xf32>
      %c0_53 = arith.constant 0 : index
      %c0_54 = arith.constant 0 : index
      %c0_55 = arith.constant 0 : index
      %61 = vector.load %arg8[%c0_53, %c0_54, %c0_55] : memref<20x18x32xf32, #tpu.memory_space<vmem>>, vector<20x18x32xf32>
      tpu.vector_store %arg8[%c0_53, %c0_54, %c0_55], %60 {strides = array<i32>} : memref<20x18x32xf32, #tpu.memory_space<vmem>>, vector<20x18x32xf32>,
      %cst_56 = arith.constant 0.000000e+00 : f32
      %62 = vector.broadcast %cst_56 : f32 to vector<10x18x32xf32>
      %c0_57 = arith.constant 0 : index
      %c0_58 = arith.constant 0 : index
      %c0_59 = arith.constant 0 : index
      %63 = vector.load %arg9[%c0_57, %c0_58, %c0_59] : memref<10x18x32xf32, #tpu.memory_space<vmem>>, vector<10x18x32xf32>
      tpu.vector_store %arg9[%c0_57, %c0_58, %c0_59], %62 {strides = array<i32>} : memref<10x18x32xf32, #tpu.memory_space<vmem>>, vector<10x18x32xf32>,
      %c0_60 = arith.constant 0 : index
      %c0_61 = arith.constant 0 : index
      %c0_62 = arith.constant 0 : index
      %c0_63 = arith.constant 0 : index
      %64 = vector.load %arg2[%c0_60, %c0_61, %c0_62, %c0_63] : memref<1x16x16x32xf32, #tpu.memory_space<vmem>>, vector<1x16x16x32xf32>
      %65 = vector.shape_cast %64 : vector<1x16x16x32xf32> to vector<16x16x32xf32>
      %c2_64 = arith.constant 2 : index
      %c1_65 = arith.constant 1 : index
      %c0_66 = arith.constant 0 : index
      %66 = vector.load %arg8[%c2_64, %c1_65, %c0_66] : memref<20x18x32xf32, #tpu.memory_space<vmem>>, vector<16x16x32xf32>
      tpu.vector_store %arg8[%c2_64, %c1_65, %c0_66], %65 {strides = array<i32>} : memref<20x18x32xf32, #tpu.memory_space<vmem>>, vector<16x16x32xf32>,
    } else {
    }
    %5 = arith.index_cast %1 : i32 to index
    %c0 = arith.constant 0 : index
    %c0_1 = arith.constant 0 : index
    %6 = vector.load %arg8[%5, %c0, %c0_1] : memref<20x18x32xf32, #tpu.memory_space<vmem>>, vector<12x18x32xf32>
    %7 = vector.extract_strided_slice %6 {offsets = [0, 0, 0], sizes = [10, 16, 32], strides = [1, 1, 1]} : vector<12x18x32xf32> to vector<10x16x32xf32>
    %8 = vector.extract_strided_slice %6 {offsets = [0, 1, 0], sizes = [10, 16, 32], strides = [1, 1, 1]} : vector<12x18x32xf32> to vector<10x16x32xf32>
    %9 = vector.extract_strided_slice %6 {offsets = [0, 2, 0], sizes = [10, 16, 32], strides = [1, 1, 1]} : vector<12x18x32xf32> to vector<10x16x32xf32>
    %10 = vector.extract_strided_slice %6 {offsets = [1, 0, 0], sizes = [10, 16, 32], strides = [1, 1, 1]} : vector<12x18x32xf32> to vector<10x16x32xf32>
    %11 = vector.extract_strided_slice %6 {offsets = [1, 1, 0], sizes = [10, 16, 32], strides = [1, 1, 1]} : vector<12x18x32xf32> to vector<10x16x32xf32>
    %12 = vector.extract_strided_slice %6 {offsets = [1, 2, 0], sizes = [10, 16, 32], strides = [1, 1, 1]} : vector<12x18x32xf32> to vector<10x16x32xf32>
    %13 = vector.extract_strided_slice %6 {offsets = [2, 0, 0], sizes = [10, 16, 32], strides = [1, 1, 1]} : vector<12x18x32xf32> to vector<10x16x32xf32>
    %14 = vector.extract_strided_slice %6 {offsets = [2, 1, 0], sizes = [10, 16, 32], strides = [1, 1, 1]} : vector<12x18x32xf32> to vector<10x16x32xf32>
    %15 = vector.extract_strided_slice %6 {offsets = [2, 2, 0], sizes = [10, 16, 32], strides = [1, 1, 1]} : vector<12x18x32xf32> to vector<10x16x32xf32>
    %16 = tpu.concatenate %7, %8, %9, %10, %11, %12, %13, %14, %15 in 2 : vector<10x16x32xf32>, vector<10x16x32xf32>, vector<10x16x32xf32>, vector<10x16x32xf32>, vector<10x16x32xf32>, vector<10x16x32xf32>, vector<10x16x32xf32>, vector<10x16x32xf32>, vector<10x16x32xf32> -> vector<10x16x288xf32>
    %17 = vector.shape_cast %16 : vector<10x16x288xf32> to vector<160x288xf32>
    %c0_2 = arith.constant 0 : index
    %c0_3 = arith.constant 0 : index
    %18 = vector.load %arg3[%c0_2, %c0_3] : memref<288x32xf32, #tpu.memory_space<vmem>>, vector<288x32xf32>
    %cst = arith.constant dense<0.000000e+00> : vector<160x32xf32>
    %19 = tpu.matmul %17, %18, %cst {dimension_numbers = #tpu.dot_dimension_numbers<[1], [0], [0], [1], [0, 0, 1, 1], [], []>} : vector<160x288xf32>, vector<288x32xf32>, vector<160x32xf32> -> vector<160x32xf32>
    %c0_4 = arith.constant 0 : index
    %c0_5 = arith.constant 0 : index
    %20 = vector.load %arg4[%c0_4, %c0_5] : memref<1x32xf32, #tpu.memory_space<vmem>>, vector<1x32xf32>
    %21 = vector.broadcast %20 : vector<1x32xf32> to vector<160x32xf32>
    %22 = arith.addf %19, %21 : vector<160x32xf32>
    %cst_6 = arith.constant 0.000000e+00 : f32
    %23 = vector.broadcast %cst_6 : f32 to vector<160x32xf32>
    %24 = arith.maximumf %22, %23 : vector<160x32xf32>
    %25 = vector.shape_cast %24 : vector<160x32xf32> to vector<10x16x32xf32>
    %c0_7 = arith.constant 0 : index
    %c1 = arith.constant 1 : index
    %c0_8 = arith.constant 0 : index
    %26 = vector.load %arg9[%c0_7, %c1, %c0_8] : memref<10x18x32xf32, #tpu.memory_space<vmem>>, vector<10x16x32xf32>
    tpu.vector_store %arg9[%c0_7, %c1, %c0_8], %25 {strides = array<i32>} : memref<10x18x32xf32, #tpu.memory_space<vmem>>, vector<10x16x32xf32>,
    %c0_i32_9 = arith.constant 0 : i32
    %27 = arith.cmpi eq, %1, %c0_i32_9 : i32
    %28 = arith.extui %27 : i1 to i32
    %c0_i32_10 = arith.constant 0 : i32
    %29 = arith.cmpi ne, %28, %c0_i32_10 : i32
    scf.if %29 {
      %cst_52 = arith.constant 0.000000e+00 : f32
      %60 = vector.broadcast %cst_52 : f32 to vector<18x32xf32>
      %c0_53 = arith.constant 0 : index
      %c0_54 = arith.constant 0 : index
      %c0_55 = arith.constant 0 : index
      %61 = vector.load %arg9[%c0_53, %c0_54, %c0_55] : memref<10x18x32xf32, #tpu.memory_space<vmem>>, vector<1x18x32xf32>
      %62 = vector.shape_cast %61 : vector<1x18x32xf32> to vector<18x32xf32>
      %63 = vector.shape_cast %60 : vector<18x32xf32> to vector<1x18x32xf32>
      tpu.vector_store %arg9[%c0_53, %c0_54, %c0_55], %63 {strides = array<i32>} : memref<10x18x32xf32, #tpu.memory_space<vmem>>, vector<1x18x32xf32>,
    } else {
    }
    %c8_i32_11 = arith.constant 8 : i32
    %30 = arith.addi %1, %c8_i32_11 : i32
    %c16_i32 = arith.constant 16 : i32
    %31 = arith.cmpi eq, %30, %c16_i32 : i32
    %32 = arith.extui %31 : i1 to i32
    %c0_i32_12 = arith.constant 0 : i32
    %33 = arith.cmpi ne, %32, %c0_i32_12 : i32
    scf.if %33 {
      %cst_52 = arith.constant 0.000000e+00 : f32
      %60 = vector.broadcast %cst_52 : f32 to vector<18x32xf32>
      %c9 = arith.constant 9 : index
      %c0_53 = arith.constant 0 : index
      %c0_54 = arith.constant 0 : index
      %61 = vector.load %arg9[%c9, %c0_53, %c0_54] : memref<10x18x32xf32, #tpu.memory_space<vmem>>, vector<1x18x32xf32>
      %62 = vector.shape_cast %61 : vector<1x18x32xf32> to vector<18x32xf32>
      %63 = vector.shape_cast %60 : vector<18x32xf32> to vector<1x18x32xf32>
      tpu.vector_store %arg9[%c9, %c0_53, %c0_54], %63 {strides = array<i32>} : memref<10x18x32xf32, #tpu.memory_space<vmem>>, vector<1x18x32xf32>,
    } else {
    }
    %c0_13 = arith.constant 0 : index
    %c0_14 = arith.constant 0 : index
    %c0_15 = arith.constant 0 : index
    %34 = vector.load %arg9[%c0_13, %c0_14, %c0_15] : memref<10x18x32xf32, #tpu.memory_space<vmem>>, vector<8x16x32xf32>
    %c0_16 = arith.constant 0 : index
    %c1_17 = arith.constant 1 : index
    %c0_18 = arith.constant 0 : index
    %35 = vector.load %arg9[%c0_16, %c1_17, %c0_18] : memref<10x18x32xf32, #tpu.memory_space<vmem>>, vector<8x16x32xf32>
    %c0_19 = arith.constant 0 : index
    %c2 = arith.constant 2 : index
    %c0_20 = arith.constant 0 : index
    %36 = vector.load %arg9[%c0_19, %c2, %c0_20] : memref<10x18x32xf32, #tpu.memory_space<vmem>>, vector<8x16x32xf32>
    %c1_21 = arith.constant 1 : index
    %c0_22 = arith.constant 0 : index
    %c0_23 = arith.constant 0 : index
    %37 = vector.load %arg9[%c1_21, %c0_22, %c0_23] : memref<10x18x32xf32, #tpu.memory_space<vmem>>, vector<8x16x32xf32>
    %c1_24 = arith.constant 1 : index
    %c1_25 = arith.constant 1 : index
    %c0_26 = arith.constant 0 : index
    %38 = vector.load %arg9[%c1_24, %c1_25, %c0_26] : memref<10x18x32xf32, #tpu.memory_space<vmem>>, vector<8x16x32xf32>
    %c1_27 = arith.constant 1 : index
    %c2_28 = arith.constant 2 : index
    %c0_29 = arith.constant 0 : index
    %39 = vector.load %arg9[%c1_27, %c2_28, %c0_29] : memref<10x18x32xf32, #tpu.memory_space<vmem>>, vector<8x16x32xf32>
    %c2_30 = arith.constant 2 : index
    %c0_31 = arith.constant 0 : index
    %c0_32 = arith.constant 0 : index
    %40 = vector.load %arg9[%c2_30, %c0_31, %c0_32] : memref<10x18x32xf32, #tpu.memory_space<vmem>>, vector<8x16x32xf32>
    %c2_33 = arith.constant 2 : index
    %c1_34 = arith.constant 1 : index
    %c0_35 = arith.constant 0 : index
    %41 = vector.load %arg9[%c2_33, %c1_34, %c0_35] : memref<10x18x32xf32, #tpu.memory_space<vmem>>, vector<8x16x32xf32>
    %c2_36 = arith.constant 2 : index
    %c2_37 = arith.constant 2 : index
    %c0_38 = arith.constant 0 : index
    %42 = vector.load %arg9[%c2_36, %c2_37, %c0_38] : memref<10x18x32xf32, #tpu.memory_space<vmem>>, vector<8x16x32xf32>
    %43 = tpu.concatenate %34, %35, %36, %37, %38, %39, %40, %41, %42 in 2 : vector<8x16x32xf32>, vector<8x16x32xf32>, vector<8x16x32xf32>, vector<8x16x32xf32>, vector<8x16x32xf32>, vector<8x16x32xf32>, vector<8x16x32xf32>, vector<8x16x32xf32>, vector<8x16x32xf32> -> vector<8x16x288xf32>
    %44 = vector.shape_cast %43 : vector<8x16x288xf32> to vector<128x288xf32>
    %c0_39 = arith.constant 0 : index
    %c0_40 = arith.constant 0 : index
    %45 = vector.load %arg5[%c0_39, %c0_40] : memref<288x32xf32, #tpu.memory_space<vmem>>, vector<288x32xf32>
    %cst_41 = arith.constant dense<0.000000e+00> : vector<128x32xf32>
    %46 = tpu.matmul %44, %45, %cst_41 {dimension_numbers = #tpu.dot_dimension_numbers<[1], [0], [0], [1], [0, 0, 1, 1], [], []>} : vector<128x288xf32>, vector<288x32xf32>, vector<128x32xf32> -> vector<128x32xf32>
    %c0_42 = arith.constant 0 : index
    %c0_43 = arith.constant 0 : index
    %47 = vector.load %arg6[%c0_42, %c0_43] : memref<1x32xf32, #tpu.memory_space<vmem>>, vector<1x32xf32>
    %48 = vector.broadcast %47 : vector<1x32xf32> to vector<128x32xf32>
    %49 = arith.addf %46, %48 : vector<128x32xf32>
    %cst_44 = arith.constant 0.000000e+00 : f32
    %50 = vector.broadcast %cst_44 : f32 to vector<128x32xf32>
    %51 = arith.maximumf %49, %50 : vector<128x32xf32>
    %52 = vector.shape_cast %51 : vector<128x32xf32> to vector<8x16x32xf32>
    %c0_45 = arith.constant 0 : index
    %53 = arith.index_cast %1 : i32 to index
    %c0_46 = arith.constant 0 : index
    %c0_47 = arith.constant 0 : index
    %54 = vector.load %arg2[%c0_45, %53, %c0_46, %c0_47] : memref<1x16x16x32xf32, #tpu.memory_space<vmem>>, vector<1x8x16x32xf32>
    %55 = vector.shape_cast %54 : vector<1x8x16x32xf32> to vector<8x16x32xf32>
    %56 = arith.addf %52, %55 : vector<8x16x32xf32>
    %c0_48 = arith.constant 0 : index
    %c0_49 = arith.constant 0 : index
    %c0_50 = arith.constant 0 : index
    %c0_51 = arith.constant 0 : index
    %57 = vector.load %arg7[%c0_48, %c0_49, %c0_50, %c0_51] : memref<1x8x16x32xf32, #tpu.memory_space<vmem>>, vector<1x8x16x32xf32>
    %58 = vector.shape_cast %57 : vector<1x8x16x32xf32> to vector<8x16x32xf32>
    %59 = vector.shape_cast %56 : vector<8x16x32xf32> to vector<1x8x16x32xf32>
    tpu.vector_store %arg7[%c0_48, %c0_49, %c0_50, %c0_51], %59 {strides = array<i32>} : memref<1x8x16x32xf32, #tpu.memory_space<vmem>>, vector<1x8x16x32xf32>,
    return
  }
  func.func @transform_0(%arg0: i32, %arg1: i32) -> (i32, i32, i32, i32) {
    %c0_i32 = arith.constant 0 : i32
    %c0_i32_0 = arith.constant 0 : i32
    %c0_i32_1 = arith.constant 0 : i32
    %c0_i32_2 = arith.constant 0 : i32
    return %arg0, %c0_i32, %c0_i32_0, %c0_i32_1 : i32, i32, i32, i32
  }
  func.func @transform_1(%arg0: i32, %arg1: i32) -> (i32, i32) {
    %c0_i32 = arith.constant 0 : i32
    %c0_i32_0 = arith.constant 0 : i32
    %c0_i32_1 = arith.constant 0 : i32
    return %c0_i32, %c0_i32_0 : i32, i32
  }
  func.func @transform_2(%arg0: i32, %arg1: i32) -> (i32, i32) {
    %c0_i32 = arith.constant 0 : i32
    %c0_i32_0 = arith.constant 0 : i32
    %c0_i32_1 = arith.constant 0 : i32
    return %c0_i32, %c0_i32_0 : i32, i32
  }
  func.func @transform_3(%arg0: i32, %arg1: i32) -> (i32, i32) {
    %c0_i32 = arith.constant 0 : i32
    %c0_i32_0 = arith.constant 0 : i32
    %c0_i32_1 = arith.constant 0 : i32
    return %c0_i32, %c0_i32_0 : i32, i32
  }
  func.func @transform_4(%arg0: i32, %arg1: i32) -> (i32, i32) {
    %c0_i32 = arith.constant 0 : i32
    %c0_i32_0 = arith.constant 0 : i32
    %c0_i32_1 = arith.constant 0 : i32
    return %c0_i32, %c0_i32_0 : i32, i32
  }
  func.func @transform_5(%arg0: i32, %arg1: i32) -> (i32, i32, i32, i32) {
    %c0_i32 = arith.constant 0 : i32
    %c0_i32_0 = arith.constant 0 : i32
    %c0_i32_1 = arith.constant 0 : i32
    return %arg0, %arg1, %c0_i32, %c0_i32_0 : i32, i32, i32, i32
  }
}

</mosaic_0001>

<llo_original>
// kernel: basic_conv_nchw.1
$region0: #{basic_conv_nchw.1}
  #allocation0 [shape = 'u32[]', space=smem, size = 0x4, offset = 0x4, fixed_abs, tag = 'smem constant byte address 0x4 - core index']
  #allocation1 [shape = 'u32[144,128]{1,0:T(1,128)}', space=vmem, size = 0x12000, scoped, tag = 'internal scratch']
  #allocation2 [shape = 'f32[20,18,32]{2,1,0:T(8,128)}', space=vmem, size = 0x3c000, scoped, tag = 'scratch operand']
  #allocation3 [shape = 'f32[10,18,32]{2,1,0:T(8,128)}', space=vmem, size = 0x1e000, scoped, tag = 'scratch operand']
  %s0 = inlined_call_operand.hbm [shape: f32[2,16,16,32], index: 0, kind: input, shape index: {}]
  %s1 = inlined_call_operand.hbm [shape: f32[288,32], index: 1, kind: input, shape index: {}]
  %s2 = inlined_call_operand.vmem [shape: f32[1,32], index: 2, kind: input, shape index: {}]
  %s3 = inlined_call_operand.hbm [shape: f32[288,32], index: 3, kind: input, shape index: {}]
  %s4 = inlined_call_operand.vmem [shape: f32[1,32], index: 4, kind: input, shape index: {}]
  %s5 = inlined_call_operand.hbm [shape: f32[2,16,16,32], index: 5, kind: output, shape index: {}]
  %s6 = sld [smem:[#allocation0]]
  $region77: #{basic_conv_nchw.1} parent=0
    _
  %s8 = ssub.s32 1, %s6
  %s9 = scalar_select 0, %s8, %s6
  $region1: #{basic_conv_nchw.1} parent=0
    #allocation4 [shape = 'u8[262144]{0}', space=vmem, size = 0x40000, scoped, tag = 'input window, operand 0']
    #allocation5 [shape = 's32[2]{0}', space=sflag, size = 0x8, scoped, tag = 'scoped memory for basic_conv_nchw.1']
    #allocation6 [shape = 's32[2]{0}', space=sflag, size = 0x8, scoped, tag = 'scoped memory for basic_conv_nchw.1']
    #allocation7 [shape = 'u8[147456]{0}', space=vmem, size = 0x24000, scoped, tag = 'input window, operand 1, single buffered']
    #allocation8 [shape = 's32[1]{0}', space=sflag, size = 0x4, scoped, tag = 'scoped memory for basic_conv_nchw.1']
    #allocation9 [shape = 'u8[147456]{0}', space=vmem, size = 0x24000, scoped, tag = 'input window, operand 3, single buffered']
    #allocation10 [shape = 'u8[131072]{0}', space=vmem, size = 0x20000, scoped, tag = 'output window, operand 0']
    %10 = vsyncpa [#allocation5], 0
    %s11 = scalar_lea.sflag [#allocation5], 1
    %12 = vsyncpa %s11, 0
    %13 = vsyncpa [#allocation8], 0
    %14 = vsyncpa [#allocation6], 0
    %s15 = scalar_lea.sflag [#allocation6], 1
    %16 = vsyncpa %s15, 0
    loop: start=0, step=1, limit=6
    $region2: #{basic_conv_nchw.1} parent=1 // loop_pre_header
      _
    $region3: #{basic_conv_nchw.1} parent=1 // loop_header
      %s18 = sphi 0, %s22
      %p19 = scmp.ge.s32.totalorder %s18, 6
      %s25 = sphi 0, %s37
      %s26 = sphi 0, %s33
      %s27 = sphi 0, %s25
      %s28 = sphi 0, %s26
      %s29 = sphi 0, %s27
      %s30 = sphi 0, %s28
      %s40 = sphi 0, %s42
      %s43 = sphi 0, %s40
      %s44 = sphi 0, %s43
      %s60 = sphi 0, %s44
      %s64 = sphi 0, %s64
      %s66 = sphi 0, %s64
      %s67 = sphi 0, %s66
      %s81 = sphi 0, %s67
      %s85 = sphi 0, %s85
      %s87 = sphi 0, %s85
      %s88 = sphi 0, %s87
      %s102 = sphi 0, %s88
      %s106 = sphi 0, %s106
      %s108 = sphi 0, %s106
      %s109 = sphi 0, %s108
      %s123 = sphi 0, %s109
      %s127 = sphi 0, %s127
      %s129 = sphi 0, %s127
      %s130 = sphi 0, %s129
      %s144 = sphi 0, %s130
      %s152 = sphi 0, %s154
      %s155 = sphi 0, %s152
      %s156 = sphi 0, %s155
      %s172 = sphi 0, %s156
    $region4: #{basic_conv_nchw.1} parent=1 // loop_header_branch
      %21 = sbr.rel (%p19) target = $region8
    $region5: #{basic_conv_nchw.1} parent=1 // loop_body
      %s23 = ssub.s32 %s18, 1
      %s24 = ssub.s32 %s18, 2
      %s31 = sadd.s32 1, %s26
      %p32 = scmp.ge.s32.totalorder %s31, 2
      %s33 = scalar_select %p32, 0, %s31
      %s34 = sadd.s32 1, %s25
      %s35 = scalar_select %p32, %s34, %s25
      %p36 = scmp.ge.s32.totalorder %s35, 2
      %s37 = scalar_select %p36, 0, %s35
      %s38 = ssub.s32 %s25, %s37
      %p39 = scmp.eq.s32.totalorder %s38, 0
      %s41 = sadd.s32 %s40, 1
      %s42 = scalar_select %p39, %s40, %s41
      %p45 = pneg %p39
      %p46 = scmp.eq.s32.totalorder %s18, 3
      %p47 = por %p45, %p46
      %p48 = scmp.ne.s32.totalorder %s40, %s43
      %p49 = scmp.eq.s32.totalorder %s18, 0
      %p50 = por %p48, %p49
      %p51 = scmp.ne.s32.totalorder %s40, %s43
      %p52 = scmp.eq.s32.totalorder %s23, 3
      %p53 = por %p51, %p52
      %p54 = scmp.ne.s32.totalorder %s43, %s44
      %p55 = scmp.eq.s32.totalorder %s23, 0
      %p56 = por %p54, %p55
      %p57 = scmp.ne.s32.totalorder %s43, %s44
      %p58 = scmp.eq.s32.totalorder %s24, 3
      %p59 = por %p57, %p58
      %p61 = scmp.ne.s32.totalorder %s44, %s60
      %p62 = scmp.eq.s32.totalorder %s24, 0
      %p63 = por %p61, %p62
      %s65 = sadd.s32 %s64, 1
      %p68 = scmp.eq.s32.totalorder %s18, 3
      %p69 = scmp.ne.s32.totalorder %s64, %s66
      %p70 = scmp.eq.s32.totalorder %s18, 0
      %p71 = por %p69, %p70
      %p72 = scmp.ne.s32.totalorder %s64, %s66
      %p73 = scmp.eq.s32.totalorder %s23, 3
      %p74 = por %p72, %p73
      %p75 = scmp.ne.s32.totalorder %s66, %s67
      %p76 = scmp.eq.s32.totalorder %s23, 0
      %p77 = por %p75, %p76
      %p78 = scmp.ne.s32.totalorder %s66, %s67
      %p79 = scmp.eq.s32.totalorder %s24, 3
      %p80 = por %p78, %p79
      %p82 = scmp.ne.s32.totalorder %s67, %s81
      %p83 = scmp.eq.s32.totalorder %s24, 0
      %p84 = por %p82, %p83
      %s86 = sadd.s32 %s85, 1
      %p89 = scmp.eq.s32.totalorder %s18, 3
      %p90 = scmp.ne.s32.totalorder %s85, %s87
      %p91 = scmp.eq.s32.totalorder %s18, 0
      %p92 = por %p90, %p91
      %p93 = scmp.ne.s32.totalorder %s85, %s87
      %p94 = scmp.eq.s32.totalorder %s23, 3
      %p95 = por %p93, %p94
      %p96 = scmp.ne.s32.totalorder %s87, %s88
      %p97 = scmp.eq.s32.totalorder %s23, 0
      %p98 = por %p96, %p97
      %p99 = scmp.ne.s32.totalorder %s87, %s88
      %p100 = scmp.eq.s32.totalorder %s24, 3
      %p101 = por %p99, %p100
      %p103 = scmp.ne.s32.totalorder %s88, %s102
      %p104 = scmp.eq.s32.totalorder %s24, 0
      %p105 = por %p103, %p104
      %s107 = sadd.s32 %s106, 1
      %p110 = scmp.eq.s32.totalorder %s18, 3
      %p111 = scmp.ne.s32.totalorder %s106, %s108
      %p112 = scmp.eq.s32.totalorder %s18, 0
      %p113 = por %p111, %p112
      %p114 = scmp.ne.s32.totalorder %s106, %s108
      %p115 = scmp.eq.s32.totalorder %s23, 3
      %p116 = por %p114, %p115
      %p117 = scmp.ne.s32.totalorder %s108, %s109
      %p118 = scmp.eq.s32.totalorder %s23, 0
      %p119 = por %p117, %p118
      %p120 = scmp.ne.s32.totalorder %s108, %s109
      %p121 = scmp.eq.s32.totalorder %s24, 3
      %p122 = por %p120, %p121
      %p124 = scmp.ne.s32.totalorder %s109, %s123
      %p125 = scmp.eq.s32.totalorder %s24, 0
      %p126 = por %p124, %p125
      %s128 = sadd.s32 %s127, 1
      %p131 = scmp.eq.s32.totalorder %s18, 3
      %p132 = scmp.ne.s32.totalorder %s127, %s129
      %p133 = scmp.eq.s32.totalorder %s18, 0
      %p134 = por %p132, %p133
      %p135 = scmp.ne.s32.totalorder %s127, %s129
      %p136 = scmp.eq.s32.totalorder %s23, 3
      %p137 = por %p135, %p136
      %p138 = scmp.ne.s32.totalorder %s129, %s130
      %p139 = scmp.eq.s32.totalorder %s23, 0
      %p140 = por %p138, %p139
      %p141 = scmp.ne.s32.totalorder %s129, %s130
      %p142 = scmp.eq.s32.totalorder %s24, 3
      %p143 = por %p141, %p142
      %p145 = scmp.ne.s32.totalorder %s130, %s144
      %p146 = scmp.eq.s32.totalorder %s24, 0
      %p147 = por %p145, %p146
      %s148 = ssub.s32 %s25, %s37
      %s149 = ssub.s32 %s26, %s33
      %s150 = sor.u32 %s148, %s149
      %p151 = scmp.eq.s32.totalorder %s150, 0
      %s153 = sadd.s32 %s152, 1
      %s154 = scalar_select %p151, %s152, %s153
      %p157 = pneg %p151
      %p158 = scmp.eq.s32.totalorder %s18, 3
      %p159 = por %p157, %p158
      %p160 = scmp.ne.s32.totalorder %s152, %s155
      %p161 = scmp.eq.s32.totalorder %s18, 0
      %p162 = por %p160, %p161
      %p163 = scmp.ne.s32.totalorder %s152, %s155
      %p164 = scmp.eq.s32.totalorder %s23, 3
      %p165 = por %p163, %p164
      %p166 = scmp.ne.s32.totalorder %s155, %s156
      %p167 = scmp.eq.s32.totalorder %s23, 0
      %p168 = por %p166, %p167
      %p169 = scmp.ne.s32.totalorder %s155, %s156
      %p170 = scmp.eq.s32.totalorder %s24, 3
      %p171 = por %p169, %p170
      %p173 = scmp.ne.s32.totalorder %s156, %s172
      %p174 = scmp.eq.s32.totalorder %s24, 0
      %p175 = por %p173, %p174
      %p176 = scmp.le.s32.totalorder 1, %s18
      %p177 = scmp.lt.s32.totalorder %s18, 5
      %p178 = pnand %p176, %p177
      %p179 = pneg %p178
      // Predicated region
      $region9: #{basic_conv_nchw.1} parent=5 // pred_check
        _
      $region10: #{basic_conv_nchw.1} parent=5 // pred_check_branch
        %181 = sbr.rel (%p178) target = $region12
      $region11: #{basic_conv_nchw.1} parent=5 // pred_region
        %s182 = ssub.s32 %s18, 1
        // Predicated region
        $region13: #{basic_conv_nchw.1} parent=11 // pred_check
          %p183 = pneg %p77
        $region14: #{basic_conv_nchw.1} parent=11 // pred_check_branch
          %185 = sbr.rel (%p183) target = $region16
        $region15: #{basic_conv_nchw.1} parent=11 // pred_region
          %s187 = ssub.s32 4608, 4608
          %188 = vsyncadd [#allocation8], %s187
          %s189 = sshll.u32 [#allocation7], 4
          %s190 = int_to_ptr.vmem [resolvable:$true] %s189
          %195 = dma.hbm_to_vmem [thread:$0]  %s1, 4608, %s190, [#allocation8], 128, 128, 8
        $region16: #{basic_conv_nchw.1} parent=11 // pred_fallthru
          _
        // Predicated region
        $region17: #{basic_conv_nchw.1} parent=11 // pred_check
          %p196 = pneg %p98
        $region18: #{basic_conv_nchw.1} parent=11 // pred_check_branch
          %198 = sbr.rel (%p196) target = $region20
        $region19: #{basic_conv_nchw.1} parent=11 // pred_region
          _
        $region20: #{basic_conv_nchw.1} parent=11 // pred_fallthru
          _
        // Predicated region
        $region21: #{basic_conv_nchw.1} parent=11 // pred_check
          %p199 = pneg %p119
        $region22: #{basic_conv_nchw.1} parent=11 // pred_check_branch
          %201 = sbr.rel (%p199) target = $region24
        $region23: #{basic_conv_nchw.1} parent=11 // pred_region
          %s203 = ssub.s32 4608, 4608
          %204 = vsyncadd [#allocation8], %s203
          %s205 = sshll.u32 [#allocation9], 4
          %s206 = int_to_ptr.vmem [resolvable:$true] %s205
          %211 = dma.hbm_to_vmem [thread:$0]  %s3, 4608, %s206, [#allocation8], 128, 128, 8
        $region24: #{basic_conv_nchw.1} parent=11 // pred_fallthru
          _
        // Predicated region
        $region25: #{basic_conv_nchw.1} parent=11 // pred_check
          %p212 = pneg %p140
        $region26: #{basic_conv_nchw.1} parent=11 // pred_check_branch
          %214 = sbr.rel (%p212) target = $region28
        $region27: #{basic_conv_nchw.1} parent=11 // pred_region
          _
        $region28: #{basic_conv_nchw.1} parent=11 // pred_fallthru
          _
      $region12: #{basic_conv_nchw.1} parent=5 // pred_fallthru
        _
      %p215 = scmp.lt.s32.totalorder %s18, 4
      // Predicated region
      $region29: #{basic_conv_nchw.1} parent=5 // pred_check
        %p216 = pneg %p215
      $region30: #{basic_conv_nchw.1} parent=5 // pred_check_branch
        %218 = sbr.rel (%p216) target = $region32
      $region31: #{basic_conv_nchw.1} parent=5 // pred_region
        // Predicated region
        $region33: #{basic_conv_nchw.1} parent=31 // pred_check
          %p219 = pneg %p50
        $region34: #{basic_conv_nchw.1} parent=31 // pred_check_branch
          %221 = sbr.rel (%p219) target = $region36
        $region35: #{basic_conv_nchw.1} parent=31 // pred_region
          %s222 = sand.u32 %s40, 1
          %s223 = scalar_lea.sflag [#allocation5], %s222
          %s224 = sand.u32 %s40, 1
          %s225 = smul.addr %s224, 256
          %s226 = scalar_lea.vmem [#allocation4], %s225
          %s228 = ssub.s32 4096, 4096
          %229 = vsyncadd %s223, %s228
          %s230 = smul.addr %s25, 32
          %s231 = smul.addr %s230, 128
          %s232 = scalar_lea.hbm %s0, %s231
          %s233 = sshll.u32 %s226, 4
          %s234 = int_to_ptr.vmem [resolvable:$true] %s233
          %239 = dma.hbm_to_vmem [thread:$0]  %s232, 4096, %s234, %s223, 128, 128, 8
        $region36: #{basic_conv_nchw.1} parent=31 // pred_fallthru
          _
      $region32: #{basic_conv_nchw.1} parent=5 // pred_fallthru
        _
      %p240 = scmp.le.s32.totalorder 1, %s18
      %p241 = scmp.lt.s32.totalorder %s18, 5
      %p242 = pnand %p240, %p241
      %p243 = pneg %p242
      // Predicated region
      $region37: #{basic_conv_nchw.1} parent=5 // pred_check
        _
      $region38: #{basic_conv_nchw.1} parent=5 // pred_check_branch
        %245 = sbr.rel (%p242) target = $region40
      $region39: #{basic_conv_nchw.1} parent=5 // pred_region
        %s246 = ssub.s32 %s18, 1
        %s247 = sand.u32 %s43, 1
        %s248 = scalar_lea.sflag [#allocation5], %s247
        %s249 = sand.u32 %s43, 1
        %s250 = smul.addr %s249, 256
        %s251 = scalar_lea.vmem [#allocation4], %s250
        // Predicated region
        $region41: #{basic_conv_nchw.1} parent=39 // pred_check
          %p252 = pneg %p56
        $region42: #{basic_conv_nchw.1} parent=39 // pred_check_branch
          %254 = sbr.rel (%p252) target = $region44
        $region43: #{basic_conv_nchw.1} parent=39 // pred_region
          %255 = dma.done %s248, 4096
        $region44: #{basic_conv_nchw.1} parent=39 // pred_fallthru
          _
        // Predicated region
        $region45: #{basic_conv_nchw.1} parent=39 // pred_check
          %p256 = pneg %p77
        $region46: #{basic_conv_nchw.1} parent=39 // pred_check_branch
          %258 = sbr.rel (%p256) target = $region48
        $region47: #{basic_conv_nchw.1} parent=39 // pred_region
          %259 = dma.done [#allocation8], 4608
        $region48: #{basic_conv_nchw.1} parent=39 // pred_fallthru
          _
        // Predicated region
        $region49: #{basic_conv_nchw.1} parent=39 // pred_check
          %p260 = pneg %p119
        $region50: #{basic_conv_nchw.1} parent=39 // pred_check_branch
          %262 = sbr.rel (%p260) target = $region52
        $region51: #{basic_conv_nchw.1} parent=39 // pred_region
          %263 = dma.done [#allocation8], 4608
        $region52: #{basic_conv_nchw.1} parent=39 // pred_fallthru
          _
        %s264 = sand.u32 %s43, 1
        %s265 = scalar_lea.sflag [#allocation5], %s264
        %s266 = sand.u32 %s43, 1
        %s267 = smul.addr %s266, 256
        %s268 = scalar_lea.vmem [#allocation4], %s267
        %p269 = pneg %p56
        %p270 = pneg %p53
        %p271 = pneg %p77
        %p272 = pneg %p74
        %p273 = pneg %p98
        %p274 = pneg %p95
        %p275 = pneg %p119
        %p276 = pneg %p116
        %p277 = pneg %p140
        %p278 = pneg %p137
        %p279 = pneg %p168
        %p280 = pneg %p165
        %s281 = sand.u32 %s155, 1
        %s282 = scalar_lea.sflag [#allocation6], %s281
        %s283 = sand.u32 %s155, 1
        %s284 = smul.addr %s283, 128
        %s285 = scalar_lea.vmem [#allocation10], %s284
        %s286 = smul.u32 8, %s28
        %s287 = smul.u32 %s28, 8
        %p288 = scmp.eq.s32.totalorder %s28, 0
        // Predicated region
        $region53: #{basic_conv_nchw.1} parent=39 // pred_check
          %p289 = pneg %p288
        $region54: #{basic_conv_nchw.1} parent=39 // pred_check_branch
          %291 = sbr.rel (%p289) target = $region56
        $region55: #{basic_conv_nchw.1} parent=39 // pred_region
          %vm292 = vcmask 261120
          %293 = vst.msk [vmem:[#allocation2] sm:$0xff] %vm292, 0.0
          %294 = vst.msk [vmem:[#allocation2 + $0x8] sm:$0xff] %vm292, 0.0
          %vm295 = vcmask 254976
          %296 = vst.msk [vmem:[#allocation2 + $0x10] sm:$0x3] %vm295, 0.0
          %297 = vst.msk [vmem:[#allocation2 + $0x18] sm:$0xff] %vm292, 0.0
          %298 = vst.msk [vmem:[#allocation2 + $0x20] sm:$0xff] %vm292, 0.0
          %299 = vst.msk [vmem:[#allocation2 + $0x28] sm:$0x3] %vm295, 0.0
          %300 = vst.msk [vmem:[#allocation2 + $0x30] sm:$0xff] %vm292, 0.0
          %301 = vst.msk [vmem:[#allocation2 + $0x38] sm:$0xff] %vm292, 0.0
          %302 = vst.msk [vmem:[#allocation2 + $0x40] sm:$0x3] %vm295, 0.0
          %303 = vst.msk [vmem:[#allocation2 + $0x48] sm:$0xff] %vm292, 0.0
          %304 = vst.msk [vmem:[#allocation2 + $0x50] sm:$0xff] %vm292, 0.0
          %305 = vst.msk [vmem:[#allocation2 + $0x58] sm:$0x3] %vm295, 0.0
          %306 = vst.msk [vmem:[#allocation2 + $0x60] sm:$0xff] %vm292, 0.0
          %307 = vst.msk [vmem:[#allocation2 + $0x68] sm:$0xff] %vm292, 0.0
          %308 = vst.msk [vmem:[#allocation2 + $0x70] sm:$0x3] %vm295, 0.0
          %309 = vst.msk [vmem:[#allocation2 + $0x78] sm:$0xff] %vm292, 0.0
          %310 = vst.msk [vmem:[#allocation2 + $0x80] sm:$0xff] %vm292, 0.0
          %311 = vst.msk [vmem:[#allocation2 + $0x88] sm:$0x3] %vm295, 0.0
          %312 = vst.msk [vmem:[#allocation2 + $0x90] sm:$0xff] %vm292, 0.0
          %313 = vst.msk [vmem:[#allocation2 + $0x98] sm:$0xff] %vm292, 0.0
          %314 = vst.msk [vmem:[#allocation2 + $0xa0] sm:$0x3] %vm295, 0.0
          %315 = vst.msk [vmem:[#allocation2 + $0xa8] sm:$0xff] %vm292, 0.0
          %316 = vst.msk [vmem:[#allocation2 + $0xb0] sm:$0xff] %vm292, 0.0
          %317 = vst.msk [vmem:[#allocation2 + $0xb8] sm:$0x3] %vm295, 0.0
          %318 = vst.msk [vmem:[#allocation2 + $0xc0] sm:$0xff] %vm292, 0.0
          %319 = vst.msk [vmem:[#allocation2 + $0xc8] sm:$0xff] %vm292, 0.0
          %320 = vst.msk [vmem:[#allocation2 + $0xd0] sm:$0x3] %vm295, 0.0
          %321 = vst.msk [vmem:[#allocation2 + $0xd8] sm:$0xff] %vm292, 0.0
          %322 = vst.msk [vmem:[#allocation2 + $0xe0] sm:$0xff] %vm292, 0.0
          %323 = vst.msk [vmem:[#allocation2 + $0xe8] sm:$0x3] %vm295, 0.0
          %324 = vst.msk [vmem:[#allocation2 + $0xf0] sm:$0xff] %vm292, 0.0
          %325 = vst.msk [vmem:[#allocation2 + $0xf8] sm:$0xff] %vm292, 0.0
          %326 = vst.msk [vmem:[#allocation2 + $0x100] sm:$0x3] %vm295, 0.0
          %327 = vst.msk [vmem:[#allocation2 + $0x108] sm:$0xff] %vm292, 0.0
          %328 = vst.msk [vmem:[#allocation2 + $0x110] sm:$0xff] %vm292, 0.0
          %329 = vst.msk [vmem:[#allocation2 + $0x118] sm:$0x3] %vm295, 0.0
          %330 = vst.msk [vmem:[#allocation2 + $0x120] sm:$0xff] %vm292, 0.0
          %331 = vst.msk [vmem:[#allocation2 + $0x128] sm:$0xff] %vm292, 0.0
          %332 = vst.msk [vmem:[#allocation2 + $0x130] sm:$0x3] %vm295, 0.0
          %333 = vst.msk [vmem:[#allocation2 + $0x138] sm:$0xff] %vm292, 0.0
          %334 = vst.msk [vmem:[#allocation2 + $0x140] sm:$0xff] %vm292, 0.0
          %335 = vst.msk [vmem:[#allocation2 + $0x148] sm:$0x3] %vm295, 0.0
          %336 = vst.msk [vmem:[#allocation2 + $0x150] sm:$0xff] %vm292, 0.0
          %337 = vst.msk [vmem:[#allocation2 + $0x158] sm:$0xff] %vm292, 0.0
          %338 = vst.msk [vmem:[#allocation2 + $0x160] sm:$0x3] %vm295, 0.0
          %339 = vst.msk [vmem:[#allocation2 + $0x168] sm:$0xff] %vm292, 0.0
          %340 = vst.msk [vmem:[#allocation2 + $0x170] sm:$0xff] %vm292, 0.0
          %341 = vst.msk [vmem:[#allocation2 + $0x178] sm:$0x3] %vm295, 0.0
          %342 = vst.msk [vmem:[#allocation2 + $0x180] sm:$0xff] %vm292, 0.0
          %343 = vst.msk [vmem:[#allocation2 + $0x188] sm:$0xff] %vm292, 0.0
          %344 = vst.msk [vmem:[#allocation2 + $0x190] sm:$0x3] %vm295, 0.0
          %345 = vst.msk [vmem:[#allocation2 + $0x198] sm:$0xff] %vm292, 0.0
          %346 = vst.msk [vmem:[#allocation2 + $0x1a0] sm:$0xff] %vm292, 0.0
          %347 = vst.msk [vmem:[#allocation2 + $0x1a8] sm:$0x3] %vm295, 0.0
          %348 = vst.msk [vmem:[#allocation2 + $0x1b0] sm:$0xff] %vm292, 0.0
          %349 = vst.msk [vmem:[#allocation2 + $0x1b8] sm:$0xff] %vm292, 0.0
          %350 = vst.msk [vmem:[#allocation2 + $0x1c0] sm:$0x3] %vm295, 0.0
          %351 = vst.msk [vmem:[#allocation2 + $0x1c8] sm:$0xff] %vm292, 0.0
          %352 = vst.msk [vmem:[#allocation2 + $0x1d0] sm:$0xff] %vm292, 0.0
          %353 = vst.msk [vmem:[#allocation2 + $0x1d8] sm:$0x3] %vm295, 0.0
          %354 = vst.msk [vmem:[#allocation3] sm:$0xff] %vm292, 0.0
          %355 = vst.msk [vmem:[#allocation3 + $0x8] sm:$0xff] %vm292, 0.0
          %356 = vst.msk [vmem:[#allocation3 + $0x10] sm:$0x3] %vm295, 0.0
          %357 = vst.msk [vmem:[#allocation3 + $0x18] sm:$0xff] %vm292, 0.0
          %358 = vst.msk [vmem:[#allocation3 + $0x20] sm:$0xff] %vm292, 0.0
          %359 = vst.msk [vmem:[#allocation3 + $0x28] sm:$0x3] %vm295, 0.0
          %360 = vst.msk [vmem:[#allocation3 + $0x30] sm:$0xff] %vm292, 0.0
          %361 = vst.msk [vmem:[#allocation3 + $0x38] sm:$0xff] %vm292, 0.0
          %362 = vst.msk [vmem:[#allocation3 + $0x40] sm:$0x3] %vm295, 0.0
          %363 = vst.msk [vmem:[#allocation3 + $0x48] sm:$0xff] %vm292, 0.0
          %364 = vst.msk [vmem:[#allocation3 + $0x50] sm:$0xff] %vm292, 0.0
          %365 = vst.msk [vmem:[#allocation3 + $0x58] sm:$0x3] %vm295, 0.0
          %366 = vst.msk [vmem:[#allocation3 + $0x60] sm:$0xff] %vm292, 0.0
          %367 = vst.msk [vmem:[#allocation3 + $0x68] sm:$0xff] %vm292, 0.0
          %368 = vst.msk [vmem:[#allocation3 + $0x70] sm:$0x3] %vm295, 0.0
          %369 = vst.msk [vmem:[#allocation3 + $0x78] sm:$0xff] %vm292, 0.0
          %370 = vst.msk [vmem:[#allocation3 + $0x80] sm:$0xff] %vm292, 0.0
          %371 = vst.msk [vmem:[#allocation3 + $0x88] sm:$0x3] %vm295, 0.0
          %372 = vst.msk [vmem:[#allocation3 + $0x90] sm:$0xff] %vm292, 0.0
          %373 = vst.msk [vmem:[#allocation3 + $0x98] sm:$0xff] %vm292, 0.0
          %374 = vst.msk [vmem:[#allocation3 + $0xa0] sm:$0x3] %vm295, 0.0
          %375 = vst.msk [vmem:[#allocation3 + $0xa8] sm:$0xff] %vm292, 0.0
          %376 = vst.msk [vmem:[#allocation3 + $0xb0] sm:$0xff] %vm292, 0.0
          %377 = vst.msk [vmem:[#allocation3 + $0xb8] sm:$0x3] %vm295, 0.0
          %378 = vst.msk [vmem:[#allocation3 + $0xc0] sm:$0xff] %vm292, 0.0
          %379 = vst.msk [vmem:[#allocation3 + $0xc8] sm:$0xff] %vm292, 0.0
          %380 = vst.msk [vmem:[#allocation3 + $0xd0] sm:$0x3] %vm295, 0.0
          %381 = vst.msk [vmem:[#allocation3 + $0xd8] sm:$0xff] %vm292, 0.0
          %382 = vst.msk [vmem:[#allocation3 + $0xe0] sm:$0xff] %vm292, 0.0
          %383 = vst.msk [vmem:[#allocation3 + $0xe8] sm:$0x3] %vm295, 0.0
          %v384 = vld [vmem:[%s251] sm:$0xff]
          %v385 = vld [vmem:[%s251 + $0x8] sm:$0xff]
          %v386 = vld [vmem:[%s251 + $0x10] sm:$0xff]
          %v387 = vld [vmem:[%s251 + $0x18] sm:$0xff]
          %v388 = vld [vmem:[%s251 + $0x20] sm:$0xff]
          %v389 = vld [vmem:[%s251 + $0x28] sm:$0xff]
          %v390 = vld [vmem:[%s251 + $0x30] sm:$0xff]
          %v391 = vld [vmem:[%s251 + $0x38] sm:$0xff]
          %v392 = vld [vmem:[%s251 + $0x40] sm:$0xff]
          %v393 = vld [vmem:[%s251 + $0x48] sm:$0xff]
          %v394 = vld [vmem:[%s251 + $0x50] sm:$0xff]
          %v395 = vld [vmem:[%s251 + $0x58] sm:$0xff]
          %v396 = vld [vmem:[%s251 + $0x60] sm:$0xff]
          %v397 = vld [vmem:[%s251 + $0x68] sm:$0xff]
          %v398 = vld [vmem:[%s251 + $0x70] sm:$0xff]
          %v399 = vld [vmem:[%s251 + $0x78] sm:$0xff]
          %v400 = vld [vmem:[%s251 + $0x80] sm:$0xff]
          %v401 = vld [vmem:[%s251 + $0x88] sm:$0xff]
          %v402 = vld [vmem:[%s251 + $0x90] sm:$0xff]
          %v403 = vld [vmem:[%s251 + $0x98] sm:$0xff]
          %v404 = vld [vmem:[%s251 + $0xa0] sm:$0xff]
          %v405 = vld [vmem:[%s251 + $0xa8] sm:$0xff]
          %v406 = vld [vmem:[%s251 + $0xb0] sm:$0xff]
          %v407 = vld [vmem:[%s251 + $0xb8] sm:$0xff]
          %v408 = vld [vmem:[%s251 + $0xc0] sm:$0xff]
          %v409 = vld [vmem:[%s251 + $0xc8] sm:$0xff]
          %v410 = vld [vmem:[%s251 + $0xd0] sm:$0xff]
          %v411 = vld [vmem:[%s251 + $0xd8] sm:$0xff]
          %v412 = vld [vmem:[%s251 + $0xe0] sm:$0xff]
          %v413 = vld [vmem:[%s251 + $0xe8] sm:$0xff]
          %v414 = vld [vmem:[%s251 + $0xf0] sm:$0xff]
          %v415 = vld [vmem:[%s251 + $0xf8] sm:$0xff]
          %s416 = scalar_lea.vmem [#allocation2], 48
          %417 = vst.msk [vmem:[%s416 + $0x1] sm:$0xff] %vm292, %v384
          %418 = vst.msk [vmem:[%s416 + $0x9] sm:$0xff] %vm292, %v385
          %419 = vst.msk [vmem:[%s416 + $0x19] sm:$0xff] %vm292, %v386
          %420 = vst.msk [vmem:[%s416 + $0x21] sm:$0xff] %vm292, %v387
          %421 = vst.msk [vmem:[%s416 + $0x31] sm:$0xff] %vm292, %v388
          %422 = vst.msk [vmem:[%s416 + $0x39] sm:$0xff] %vm292, %v389
          %423 = vst.msk [vmem:[%s416 + $0x49] sm:$0xff] %vm292, %v390
          %424 = vst.msk [vmem:[%s416 + $0x51] sm:$0xff] %vm292, %v391
          %425 = vst.msk [vmem:[%s416 + $0x61] sm:$0xff] %vm292, %v392
          %426 = vst.msk [vmem:[%s416 + $0x69] sm:$0xff] %vm292, %v393
          %427 = vst.msk [vmem:[%s416 + $0x79] sm:$0xff] %vm292, %v394
          %428 = vst.msk [vmem:[%s416 + $0x81] sm:$0xff] %vm292, %v395
          %429 = vst.msk [vmem:[%s416 + $0x91] sm:$0xff] %vm292, %v396
          %430 = vst.msk [vmem:[%s416 + $0x99] sm:$0xff] %vm292, %v397
          %431 = vst.msk [vmem:[%s416 + $0xa9] sm:$0xff] %vm292, %v398
          %432 = vst.msk [vmem:[%s416 + $0xb1] sm:$0xff] %vm292, %v399
          %433 = vst.msk [vmem:[%s416 + $0xc1] sm:$0xff] %vm292, %v400
          %434 = vst.msk [vmem:[%s416 + $0xc9] sm:$0xff] %vm292, %v401
          %435 = vst.msk [vmem:[%s416 + $0xd9] sm:$0xff] %vm292, %v402
          %436 = vst.msk [vmem:[%s416 + $0xe1] sm:$0xff] %vm292, %v403
          %437 = vst.msk [vmem:[%s416 + $0xf1] sm:$0xff] %vm292, %v404
          %438 = vst.msk [vmem:[%s416 + $0xf9] sm:$0xff] %vm292, %v405
          %439 = vst.msk [vmem:[%s416 + $0x109] sm:$0xff] %vm292, %v406
          %440 = vst.msk [vmem:[%s416 + $0x111] sm:$0xff] %vm292, %v407
          %441 = vst.msk [vmem:[%s416 + $0x121] sm:$0xff] %vm292, %v408
          %442 = vst.msk [vmem:[%s416 + $0x129] sm:$0xff] %vm292, %v409
          %443 = vst.msk [vmem:[%s416 + $0x139] sm:$0xff] %vm292, %v410
          %444 = vst.msk [vmem:[%s416 + $0x141] sm:$0xff] %vm292, %v411
          %445 = vst.msk [vmem:[%s416 + $0x151] sm:$0xff] %vm292, %v412
          %446 = vst.msk [vmem:[%s416 + $0x159] sm:$0xff] %vm292, %v413
          %447 = vst.msk [vmem:[%s416 + $0x169] sm:$0xff] %vm292, %v414
          %448 = vst.msk [vmem:[%s416 + $0x171] sm:$0xff] %vm292, %v415
        $region56: #{basic_conv_nchw.1} parent=39 // pred_fallthru
          _
        %s449 = smul.u32 %s287, 24
        %s450 = scalar_lea.vmem [#allocation2], %s449
        %v451 = vld [vmem:[%s450] sm:$0xff]
        %v452 = vld [vmem:[%s450 + $0x8] sm:$0xff]
        %v453 = vld [vmem:[%s450 + $0x10] sm:$0x3]
        %v454 = vld [vmem:[%s450 + $0x18] sm:$0xff]
        %v455 = vld [vmem:[%s450 + $0x20] sm:$0xff]
        %v456 = vld [vmem:[%s450 + $0x28] sm:$0x3]
        %v457 = vld [vmem:[%s450 + $0x30] sm:$0xff]
        %v458 = vld [vmem:[%s450 + $0x38] sm:$0xff]
        %v459 = vld [vmem:[%s450 + $0x40] sm:$0x3]
        %v460 = vld [vmem:[%s450 + $0x48] sm:$0xff]
        %v461 = vld [vmem:[%s450 + $0x50] sm:$0xff]
        %v462 = vld [vmem:[%s450 + $0x58] sm:$0x3]
        %v463 = vld [vmem:[%s450 + $0x60] sm:$0xff]
        %v464 = vld [vmem:[%s450 + $0x68] sm:$0xff]
        %v465 = vld [vmem:[%s450 + $0x70] sm:$0x3]
        %v466 = vld [vmem:[%s450 + $0x78] sm:$0xff]
        %v467 = vld [vmem:[%s450 + $0x80] sm:$0xff]
        %v468 = vld [vmem:[%s450 + $0x88] sm:$0x3]
        %v469 = vld [vmem:[%s450 + $0x90] sm:$0xff]
        %v470 = vld [vmem:[%s450 + $0x98] sm:$0xff]
        %v471 = vld [vmem:[%s450 + $0xa0] sm:$0x3]
        %v472 = vld [vmem:[%s450 + $0xa8] sm:$0xff]
        %v473 = vld [vmem:[%s450 + $0xb0] sm:$0xff]
        %v474 = vld [vmem:[%s450 + $0xb8] sm:$0x3]
        %v475 = vld [vmem:[%s450 + $0xc0] sm:$0xff]
        %v476 = vld [vmem:[%s450 + $0xc8] sm:$0xff]
        %v477 = vld [vmem:[%s450 + $0xd0] sm:$0x3]
        %v478 = vld [vmem:[%s450 + $0xd8] sm:$0xff]
        %v479 = vld [vmem:[%s450 + $0xe0] sm:$0xff]
        %v480 = vld [vmem:[%s450 + $0xe8] sm:$0x3]
        %v481 = vld [vmem:[%s450 + $0xf0] sm:$0xff]
        %v482 = vld [vmem:[%s450 + $0xf8] sm:$0xff]
        %v483 = vld [vmem:[%s450 + $0x100] sm:$0x3]
        %v484 = vld [vmem:[%s450 + $0x108] sm:$0xff]
        %v485 = vld [vmem:[%s450 + $0x110] sm:$0xff]
        %v486 = vld [vmem:[%s450 + $0x118] sm:$0x3]
        %vm517 = vcmask 1046528
        %v518 = vrot.slane %v451, 1
        %v519 = vrot.slane %v452, 1
        %v520 = vsel %vm517, %v518, %v519
        %v521 = vrot.slane %v453, 1
        %v522 = vsel %vm517, %v519, %v521
        %v523 = vrot.slane %v454, 1
        %v524 = vrot.slane %v455, 1
        %v525 = vsel %vm517, %v523, %v524
        %v526 = vrot.slane %v456, 1
        %v527 = vsel %vm517, %v524, %v526
        %v528 = vrot.slane %v457, 1
        %v529 = vrot.slane %v458, 1
        %v530 = vsel %vm517, %v528, %v529
        %v531 = vrot.slane %v459, 1
        %v532 = vsel %vm517, %v529, %v531
        %v533 = vrot.slane %v460, 1
        %v534 = vrot.slane %v461, 1
        %v535 = vsel %vm517, %v533, %v534
        %v536 = vrot.slane %v462, 1
        %v537 = vsel %vm517, %v534, %v536
        %v538 = vrot.slane %v463, 1
        %v539 = vrot.slane %v464, 1
        %v540 = vsel %vm517, %v538, %v539
        %v541 = vrot.slane %v465, 1
        %v542 = vsel %vm517, %v539, %v541
        %v543 = vrot.slane %v466, 1
        %v544 = vrot.slane %v467, 1
        %v545 = vsel %vm517, %v543, %v544
        %v546 = vrot.slane %v468, 1
        %v547 = vsel %vm517, %v544, %v546
        %v548 = vrot.slane %v469, 1
        %v549 = vrot.slane %v470, 1
        %v550 = vsel %vm517, %v548, %v549
        %v551 = vrot.slane %v471, 1
        %v552 = vsel %vm517, %v549, %v551
        %v553 = vrot.slane %v472, 1
        %v554 = vrot.slane %v473, 1
        %v555 = vsel %vm517, %v553, %v554
        %v556 = vrot.slane %v474, 1
        %v557 = vsel %vm517, %v554, %v556
        %v558 = vrot.slane %v475, 1
        %v559 = vrot.slane %v476, 1
        %v560 = vsel %vm517, %v558, %v559
        %v561 = vrot.slane %v477, 1
        %v562 = vsel %vm517, %v559, %v561
        %v563 = vrot.slane %v478, 1
        %v564 = vrot.slane %v479, 1
        %v565 = vsel %vm517, %v563, %v564
        %v566 = vrot.slane %v480, 1
        %v567 = vsel %vm517, %v564, %v566
        %568 = vrot.lane.b32.xlu0 %v520, 32
        %v569 = vpop.permute.xlu0 %568
        %570 = vrot.lane.b32.xlu0 %v522, 32
        %v571 = vpop.permute.xlu0 %570
        %572 = vrot.lane.b32.xlu0 %v525, 32
        %v573 = vpop.permute.xlu0 %572
        %574 = vrot.lane.b32.xlu0 %v527, 32
        %v575 = vpop.permute.xlu0 %574
        %576 = vrot.lane.b32.xlu0 %v530, 32
        %v577 = vpop.permute.xlu0 %576
        %578 = vrot.lane.b32.xlu0 %v532, 32
        %v579 = vpop.permute.xlu0 %578
        %580 = vrot.lane.b32.xlu0 %v535, 32
        %v581 = vpop.permute.xlu0 %580
        %582 = vrot.lane.b32.xlu0 %v537, 32
        %v583 = vpop.permute.xlu0 %582
        %584 = vrot.lane.b32.xlu0 %v540, 32
        %v585 = vpop.permute.xlu0 %584
        %586 = vrot.lane.b32.xlu0 %v542, 32
        %v587 = vpop.permute.xlu0 %586
        %588 = vrot.lane.b32.xlu0 %v545, 32
        %v589 = vpop.permute.xlu0 %588
        %590 = vrot.lane.b32.xlu0 %v547, 32
        %v591 = vpop.permute.xlu0 %590
        %592 = vrot.lane.b32.xlu0 %v550, 32
        %v593 = vpop.permute.xlu0 %592
        %594 = vrot.lane.b32.xlu0 %v552, 32
        %v595 = vpop.permute.xlu0 %594
        %596 = vrot.lane.b32.xlu0 %v555, 32
        %v597 = vpop.permute.xlu0 %596
        %598 = vrot.lane.b32.xlu0 %v557, 32
        %v599 = vpop.permute.xlu0 %598
        %600 = vrot.lane.b32.xlu0 %v560, 32
        %v601 = vpop.permute.xlu0 %600
        %602 = vrot.lane.b32.xlu0 %v562, 32
        %v603 = vpop.permute.xlu0 %602
        %604 = vrot.lane.b32.xlu0 %v565, 32
        %v605 = vpop.permute.xlu0 %604
        %606 = vrot.lane.b32.xlu0 %v567, 32
        %v607 = vpop.permute.xlu0 %606
        %vm628 = vcmask 1045504
        %v629 = vrot.slane %v451, 2
        %v630 = vrot.slane %v452, 2
        %v631 = vsel %vm628, %v629, %v630
        %v632 = vrot.slane %v453, 2
        %v633 = vsel %vm628, %v630, %v632
        %v634 = vrot.slane %v454, 2
        %v635 = vrot.slane %v455, 2
        %v636 = vsel %vm628, %v634, %v635
        %v637 = vrot.slane %v456, 2
        %v638 = vsel %vm628, %v635, %v637
        %v639 = vrot.slane %v457, 2
        %v640 = vrot.slane %v458, 2
        %v641 = vsel %vm628, %v639, %v640
        %v642 = vrot.slane %v459, 2
        %v643 = vsel %vm628, %v640, %v642
        %v644 = vrot.slane %v460, 2
        %v645 = vrot.slane %v461, 2
        %v646 = vsel %vm628, %v644, %v645
        %v647 = vrot.slane %v462, 2
        %v648 = vsel %vm628, %v645, %v647
        %v649 = vrot.slane %v463, 2
        %v650 = vrot.slane %v464, 2
        %v651 = vsel %vm628, %v649, %v650
        %v652 = vrot.slane %v465, 2
        %v653 = vsel %vm628, %v650, %v652
        %v654 = vrot.slane %v466, 2
        %v655 = vrot.slane %v467, 2
        %v656 = vsel %vm628, %v654, %v655
        %v657 = vrot.slane %v468, 2
        %v658 = vsel %vm628, %v655, %v657
        %v659 = vrot.slane %v469, 2
        %v660 = vrot.slane %v470, 2
        %v661 = vsel %vm628, %v659, %v660
        %v662 = vrot.slane %v471, 2
        %v663 = vsel %vm628, %v660, %v662
        %v664 = vrot.slane %v472, 2
        %v665 = vrot.slane %v473, 2
        %v666 = vsel %vm628, %v664, %v665
        %v667 = vrot.slane %v474, 2
        %v668 = vsel %vm628, %v665, %v667
        %v669 = vrot.slane %v475, 2
        %v670 = vrot.slane %v476, 2
        %v671 = vsel %vm628, %v669, %v670
        %v672 = vrot.slane %v477, 2
        %v673 = vsel %vm628, %v670, %v672
        %v674 = vrot.slane %v478, 2
        %v675 = vrot.slane %v479, 2
        %v676 = vsel %vm628, %v674, %v675
        %v677 = vrot.slane %v480, 2
        %v678 = vsel %vm628, %v675, %v677
        %679 = vrot.lane.b32.xlu0 %v631, 64
        %v680 = vpop.permute.xlu0 %679
        %681 = vrot.lane.b32.xlu0 %v633, 64
        %v682 = vpop.permute.xlu0 %681
        %683 = vrot.lane.b32.xlu0 %v636, 64
        %v684 = vpop.permute.xlu0 %683
        %685 = vrot.lane.b32.xlu0 %v638, 64
        %v686 = vpop.permute.xlu0 %685
        %687 = vrot.lane.b32.xlu0 %v641, 64
        %v688 = vpop.permute.xlu0 %687
        %689 = vrot.lane.b32.xlu0 %v643, 64
        %v690 = vpop.permute.xlu0 %689
        %691 = vrot.lane.b32.xlu0 %v646, 64
        %v692 = vpop.permute.xlu0 %691
        %693 = vrot.lane.b32.xlu0 %v648, 64
        %v694 = vpop.permute.xlu0 %693
        %695 = vrot.lane.b32.xlu0 %v651, 64
        %v696 = vpop.permute.xlu0 %695
        %697 = vrot.lane.b32.xlu0 %v653, 64
        %v698 = vpop.permute.xlu0 %697
        %699 = vrot.lane.b32.xlu0 %v656, 64
        %v700 = vpop.permute.xlu0 %699
        %701 = vrot.lane.b32.xlu0 %v658, 64
        %v702 = vpop.permute.xlu0 %701
        %703 = vrot.lane.b32.xlu0 %v661, 64
        %v704 = vpop.permute.xlu0 %703
        %705 = vrot.lane.b32.xlu0 %v663, 64
        %v706 = vpop.permute.xlu0 %705
        %707 = vrot.lane.b32.xlu0 %v666, 64
        %v708 = vpop.permute.xlu0 %707
        %709 = vrot.lane.b32.xlu0 %v668, 64
        %v710 = vpop.permute.xlu0 %709
        %711 = vrot.lane.b32.xlu0 %v671, 64
        %v712 = vpop.permute.xlu0 %711
        %713 = vrot.lane.b32.xlu0 %v673, 64
        %v714 = vpop.permute.xlu0 %713
        %715 = vrot.lane.b32.xlu0 %v676, 64
        %v716 = vpop.permute.xlu0 %715
        %717 = vrot.lane.b32.xlu0 %v678, 64
        %v718 = vpop.permute.xlu0 %717
        %741 = vrot.lane.b32.xlu0 %v454, 96
        %v742 = vpop.permute.xlu0 %741
        %743 = vrot.lane.b32.xlu0 %v455, 96
        %v744 = vpop.permute.xlu0 %743
        %745 = vrot.lane.b32.xlu0 %v457, 96
        %v746 = vpop.permute.xlu0 %745
        %747 = vrot.lane.b32.xlu0 %v458, 96
        %v748 = vpop.permute.xlu0 %747
        %749 = vrot.lane.b32.xlu0 %v460, 96
        %v750 = vpop.permute.xlu0 %749
        %751 = vrot.lane.b32.xlu0 %v461, 96
        %v752 = vpop.permute.xlu0 %751
        %753 = vrot.lane.b32.xlu0 %v463, 96
        %v754 = vpop.permute.xlu0 %753
        %755 = vrot.lane.b32.xlu0 %v464, 96
        %v756 = vpop.permute.xlu0 %755
        %757 = vrot.lane.b32.xlu0 %v466, 96
        %v758 = vpop.permute.xlu0 %757
        %759 = vrot.lane.b32.xlu0 %v467, 96
        %v760 = vpop.permute.xlu0 %759
        %761 = vrot.lane.b32.xlu0 %v469, 96
        %v762 = vpop.permute.xlu0 %761
        %763 = vrot.lane.b32.xlu0 %v470, 96
        %v764 = vpop.permute.xlu0 %763
        %765 = vrot.lane.b32.xlu0 %v472, 96
        %v766 = vpop.permute.xlu0 %765
        %767 = vrot.lane.b32.xlu0 %v473, 96
        %v768 = vpop.permute.xlu0 %767
        %769 = vrot.lane.b32.xlu0 %v475, 96
        %v770 = vpop.permute.xlu0 %769
        %771 = vrot.lane.b32.xlu0 %v476, 96
        %v772 = vpop.permute.xlu0 %771
        %773 = vrot.lane.b32.xlu0 %v478, 96
        %v774 = vpop.permute.xlu0 %773
        %775 = vrot.lane.b32.xlu0 %v479, 96
        %v776 = vpop.permute.xlu0 %775
        %777 = vrot.lane.b32.xlu0 %v481, 96
        %v778 = vpop.permute.xlu0 %777
        %779 = vrot.lane.b32.xlu0 %v482, 96
        %v780 = vpop.permute.xlu0 %779
        %v802 = vrot.slane %v481, 1
        %v803 = vrot.slane %v482, 1
        %v804 = vsel %vm517, %v802, %v803
        %v805 = vrot.slane %v483, 1
        %v806 = vsel %vm517, %v803, %v805
        %v827 = vrot.slane %v481, 2
        %v828 = vrot.slane %v482, 2
        %v829 = vsel %vm628, %v827, %v828
        %v830 = vrot.slane %v483, 2
        %v831 = vsel %vm628, %v828, %v830
        %832 = vrot.lane.b32.xlu0 %v636, 32
        %v833 = vpop.permute.xlu0 %832
        %834 = vrot.lane.b32.xlu0 %v638, 32
        %v835 = vpop.permute.xlu0 %834
        %836 = vrot.lane.b32.xlu0 %v641, 32
        %v837 = vpop.permute.xlu0 %836
        %838 = vrot.lane.b32.xlu0 %v643, 32
        %v839 = vpop.permute.xlu0 %838
        %840 = vrot.lane.b32.xlu0 %v646, 32
        %v841 = vpop.permute.xlu0 %840
        %842 = vrot.lane.b32.xlu0 %v648, 32
        %v843 = vpop.permute.xlu0 %842
        %844 = vrot.lane.b32.xlu0 %v651, 32
        %v845 = vpop.permute.xlu0 %844
        %846 = vrot.lane.b32.xlu0 %v653, 32
        %v847 = vpop.permute.xlu0 %846
        %848 = vrot.lane.b32.xlu0 %v656, 32
        %v849 = vpop.permute.xlu0 %848
        %850 = vrot.lane.b32.xlu0 %v658, 32
        %v851 = vpop.permute.xlu0 %850
        %852 = vrot.lane.b32.xlu0 %v661, 32
        %v853 = vpop.permute.xlu0 %852
        %854 = vrot.lane.b32.xlu0 %v663, 32
        %v855 = vpop.permute.xlu0 %854
        %856 = vrot.lane.b32.xlu0 %v666, 32
        %v857 = vpop.permute.xlu0 %856
        %858 = vrot.lane.b32.xlu0 %v668, 32
        %v859 = vpop.permute.xlu0 %858
        %860 = vrot.lane.b32.xlu0 %v671, 32
        %v861 = vpop.permute.xlu0 %860
        %862 = vrot.lane.b32.xlu0 %v673, 32
        %v863 = vpop.permute.xlu0 %862
        %864 = vrot.lane.b32.xlu0 %v676, 32
        %v865 = vpop.permute.xlu0 %864
        %866 = vrot.lane.b32.xlu0 %v678, 32
        %v867 = vpop.permute.xlu0 %866
        %868 = vrot.lane.b32.xlu0 %v829, 32
        %v869 = vpop.permute.xlu0 %868
        %870 = vrot.lane.b32.xlu0 %v831, 32
        %v871 = vpop.permute.xlu0 %870
        %894 = vrot.lane.b32.xlu0 %v457, 64
        %v895 = vpop.permute.xlu0 %894
        %896 = vrot.lane.b32.xlu0 %v458, 64
        %v897 = vpop.permute.xlu0 %896
        %898 = vrot.lane.b32.xlu0 %v460, 64
        %v899 = vpop.permute.xlu0 %898
        %900 = vrot.lane.b32.xlu0 %v461, 64
        %v901 = vpop.permute.xlu0 %900
        %902 = vrot.lane.b32.xlu0 %v463, 64
        %v903 = vpop.permute.xlu0 %902
        %904 = vrot.lane.b32.xlu0 %v464, 64
        %v905 = vpop.permute.xlu0 %904
        %906 = vrot.lane.b32.xlu0 %v466, 64
        %v907 = vpop.permute.xlu0 %906
        %908 = vrot.lane.b32.xlu0 %v467, 64
        %v909 = vpop.permute.xlu0 %908
        %910 = vrot.lane.b32.xlu0 %v469, 64
        %v911 = vpop.permute.xlu0 %910
        %912 = vrot.lane.b32.xlu0 %v470, 64
        %v913 = vpop.permute.xlu0 %912
        %914 = vrot.lane.b32.xlu0 %v472, 64
        %v915 = vpop.permute.xlu0 %914
        %916 = vrot.lane.b32.xlu0 %v473, 64
        %v917 = vpop.permute.xlu0 %916
        %918 = vrot.lane.b32.xlu0 %v475, 64
        %v919 = vpop.permute.xlu0 %918
        %920 = vrot.lane.b32.xlu0 %v476, 64
        %v921 = vpop.permute.xlu0 %920
        %922 = vrot.lane.b32.xlu0 %v478, 64
        %v923 = vpop.permute.xlu0 %922
        %924 = vrot.lane.b32.xlu0 %v479, 64
        %v925 = vpop.permute.xlu0 %924
        %926 = vrot.lane.b32.xlu0 %v481, 64
        %v927 = vpop.permute.xlu0 %926
        %928 = vrot.lane.b32.xlu0 %v482, 64
        %v929 = vpop.permute.xlu0 %928
        %930 = vrot.lane.b32.xlu0 %v484, 64
        %v931 = vpop.permute.xlu0 %930
        %932 = vrot.lane.b32.xlu0 %v485, 64
        %v933 = vpop.permute.xlu0 %932
        %v955 = vrot.slane %v484, 1
        %v956 = vrot.slane %v485, 1
        %v957 = vsel %vm517, %v955, %v956
        %v958 = vrot.slane %v486, 1
        %v959 = vsel %vm517, %v956, %v958
        %960 = vrot.lane.b32.xlu0 %v530, 96
        %v961 = vpop.permute.xlu0 %960
        %962 = vrot.lane.b32.xlu0 %v532, 96
        %v963 = vpop.permute.xlu0 %962
        %964 = vrot.lane.b32.xlu0 %v535, 96
        %v965 = vpop.permute.xlu0 %964
        %966 = vrot.lane.b32.xlu0 %v537, 96
        %v967 = vpop.permute.xlu0 %966
        %968 = vrot.lane.b32.xlu0 %v540, 96
        %v969 = vpop.permute.xlu0 %968
        %970 = vrot.lane.b32.xlu0 %v542, 96
        %v971 = vpop.permute.xlu0 %970
        %972 = vrot.lane.b32.xlu0 %v545, 96
        %v973 = vpop.permute.xlu0 %972
        %974 = vrot.lane.b32.xlu0 %v547, 96
        %v975 = vpop.permute.xlu0 %974
        %976 = vrot.lane.b32.xlu0 %v550, 96
        %v977 = vpop.permute.xlu0 %976
        %978 = vrot.lane.b32.xlu0 %v552, 96
        %v979 = vpop.permute.xlu0 %978
        %980 = vrot.lane.b32.xlu0 %v555, 96
        %v981 = vpop.permute.xlu0 %980
        %982 = vrot.lane.b32.xlu0 %v557, 96
        %v983 = vpop.permute.xlu0 %982
        %984 = vrot.lane.b32.xlu0 %v560, 96
        %v985 = vpop.permute.xlu0 %984
        %986 = vrot.lane.b32.xlu0 %v562, 96
        %v987 = vpop.permute.xlu0 %986
        %988 = vrot.lane.b32.xlu0 %v565, 96
        %v989 = vpop.permute.xlu0 %988
        %990 = vrot.lane.b32.xlu0 %v567, 96
        %v991 = vpop.permute.xlu0 %990
        %992 = vrot.lane.b32.xlu0 %v804, 96
        %v993 = vpop.permute.xlu0 %992
        %994 = vrot.lane.b32.xlu0 %v806, 96
        %v995 = vpop.permute.xlu0 %994
        %996 = vrot.lane.b32.xlu0 %v957, 96
        %v997 = vpop.permute.xlu0 %996
        %998 = vrot.lane.b32.xlu0 %v959, 96
        %v999 = vpop.permute.xlu0 %998
        %v1020 = vrot.slane %v484, 2
        %v1021 = vrot.slane %v485, 2
        %v1022 = vsel %vm628, %v1020, %v1021
        %v1023 = vrot.slane %v486, 2
        %v1024 = vsel %vm628, %v1021, %v1023
        %vm1025 = vcmask 261120
        %v1026 = vsel %vm1025, %v451, %v569
        %v1027 = vsel %vm1025, %v452, %v571
        %v1028 = vsel %vm1025, %v454, %v573
        %v1029 = vsel %vm1025, %v455, %v575
        %v1030 = vsel %vm1025, %v457, %v577
        %v1031 = vsel %vm1025, %v458, %v579
        %v1032 = vsel %vm1025, %v460, %v581
        %v1033 = vsel %vm1025, %v461, %v583
        %v1034 = vsel %vm1025, %v463, %v585
        %v1035 = vsel %vm1025, %v464, %v587
        %v1036 = vsel %vm1025, %v466, %v589
        %v1037 = vsel %vm1025, %v467, %v591
        %v1038 = vsel %vm1025, %v469, %v593
        %v1039 = vsel %vm1025, %v470, %v595
        %v1040 = vsel %vm1025, %v472, %v597
        %v1041 = vsel %vm1025, %v473, %v599
        %v1042 = vsel %vm1025, %v475, %v601
        %v1043 = vsel %vm1025, %v476, %v603
        %v1044 = vsel %vm1025, %v478, %v605
        %v1045 = vsel %vm1025, %v479, %v607
        %vm1046 = vcmask 523264
        %v1047 = vsel %vm1046, %v1026, %v680
        %v1048 = vsel %vm1046, %v1027, %v682
        %v1049 = vsel %vm1046, %v1028, %v684
        %v1050 = vsel %vm1046, %v1029, %v686
        %v1051 = vsel %vm1046, %v1030, %v688
        %v1052 = vsel %vm1046, %v1031, %v690
        %v1053 = vsel %vm1046, %v1032, %v692
        %v1054 = vsel %vm1046, %v1033, %v694
        %v1055 = vsel %vm1046, %v1034, %v696
        %v1056 = vsel %vm1046, %v1035, %v698
        %v1057 = vsel %vm1046, %v1036, %v700
        %v1058 = vsel %vm1046, %v1037, %v702
        %v1059 = vsel %vm1046, %v1038, %v704
        %v1060 = vsel %vm1046, %v1039, %v706
        %v1061 = vsel %vm1046, %v1040, %v708
        %v1062 = vsel %vm1046, %v1041, %v710
        %v1063 = vsel %vm1046, %v1042, %v712
        %v1064 = vsel %vm1046, %v1043, %v714
        %v1065 = vsel %vm1046, %v1044, %v716
        %v1066 = vsel %vm1046, %v1045, %v718
        %vm1067 = vcmask 785408
        %v1068 = vsel %vm1067, %v1047, %v742
        %v1069 = vsel %vm1067, %v1048, %v744
        %v1070 = vsel %vm1067, %v1049, %v746
        %v1071 = vsel %vm1067, %v1050, %v748
        %v1072 = vsel %vm1067, %v1051, %v750
        %v1073 = vsel %vm1067, %v1052, %v752
        %v1074 = vsel %vm1067, %v1053, %v754
        %v1075 = vsel %vm1067, %v1054, %v756
        %v1076 = vsel %vm1067, %v1055, %v758
        %v1077 = vsel %vm1067, %v1056, %v760
        %v1078 = vsel %vm1067, %v1057, %v762
        %v1079 = vsel %vm1067, %v1058, %v764
        %v1080 = vsel %vm1067, %v1059, %v766
        %v1081 = vsel %vm1067, %v1060, %v768
        %v1082 = vsel %vm1067, %v1061, %v770
        %v1083 = vsel %vm1067, %v1062, %v772
        %v1084 = vsel %vm1067, %v1063, %v774
        %v1085 = vsel %vm1067, %v1064, %v776
        %v1086 = vsel %vm1067, %v1065, %v778
        %v1087 = vsel %vm1067, %v1066, %v780
        %v1088 = vsel %vm1025, %v525, %v833
        %v1089 = vsel %vm1025, %v527, %v835
        %v1090 = vsel %vm1025, %v530, %v837
        %v1091 = vsel %vm1025, %v532, %v839
        %v1092 = vsel %vm1025, %v535, %v841
        %v1093 = vsel %vm1025, %v537, %v843
        %v1094 = vsel %vm1025, %v540, %v845
        %v1095 = vsel %vm1025, %v542, %v847
        %v1096 = vsel %vm1025, %v545, %v849
        %v1097 = vsel %vm1025, %v547, %v851
        %v1098 = vsel %vm1025, %v550, %v853
        %v1099 = vsel %vm1025, %v552, %v855
        %v1100 = vsel %vm1025, %v555, %v857
        %v1101 = vsel %vm1025, %v557, %v859
        %v1102 = vsel %vm1025, %v560, %v861
        %v1103 = vsel %vm1025, %v562, %v863
        %v1104 = vsel %vm1025, %v565, %v865
        %v1105 = vsel %vm1025, %v567, %v867
        %v1106 = vsel %vm1025, %v804, %v869
        %v1107 = vsel %vm1025, %v806, %v871
        %v1108 = vsel %vm1046, %v1088, %v895
        %v1109 = vsel %vm1046, %v1089, %v897
        %v1110 = vsel %vm1046, %v1090, %v899
        %v1111 = vsel %vm1046, %v1091, %v901
        %v1112 = vsel %vm1046, %v1092, %v903
        %v1113 = vsel %vm1046, %v1093, %v905
        %v1114 = vsel %vm1046, %v1094, %v907
        %v1115 = vsel %vm1046, %v1095, %v909
        %v1116 = vsel %vm1046, %v1096, %v911
        %v1117 = vsel %vm1046, %v1097, %v913
        %v1118 = vsel %vm1046, %v1098, %v915
        %v1119 = vsel %vm1046, %v1099, %v917
        %v1120 = vsel %vm1046, %v1100, %v919
        %v1121 = vsel %vm1046, %v1101, %v921
        %v1122 = vsel %vm1046, %v1102, %v923
        %v1123 = vsel %vm1046, %v1103, %v925
        %v1124 = vsel %vm1046, %v1104, %v927
        %v1125 = vsel %vm1046, %v1105, %v929
        %v1126 = vsel %vm1046, %v1106, %v931
        %v1127 = vsel %vm1046, %v1107, %v933
        %v1128 = vsel %vm1067, %v1108, %v961
        %v1129 = vsel %vm1067, %v1109, %v963
        %v1130 = vsel %vm1067, %v1110, %v965
        %v1131 = vsel %vm1067, %v1111, %v967
        %v1132 = vsel %vm1067, %v1112, %v969
        %v1133 = vsel %vm1067, %v1113, %v971
        %v1134 = vsel %vm1067, %v1114, %v973
        %v1135 = vsel %vm1067, %v1115, %v975
        %v1136 = vsel %vm1067, %v1116, %v977
        %v1137 = vsel %vm1067, %v1117, %v979
        %v1138 = vsel %vm1067, %v1118, %v981
        %v1139 = vsel %vm1067, %v1119, %v983
        %v1140 = vsel %vm1067, %v1120, %v985
        %v1141 = vsel %vm1067, %v1121, %v987
        %v1142 = vsel %vm1067, %v1122, %v989
        %v1143 = vsel %vm1067, %v1123, %v991
        %v1144 = vsel %vm1067, %v1124, %v993
        %v1145 = vsel %vm1067, %v1125, %v995
        %v1146 = vsel %vm1067, %v1126, %v997
        %v1147 = vsel %vm1067, %v1127, %v999
        %v1148 = vld [vmem:[#allocation7] sm:$0xff]
        %v1149 = vld [vmem:[#allocation7 + $0x8] sm:$0xff]
        %v1150 = vld [vmem:[#allocation7 + $0x10] sm:$0xff]
        %v1151 = vld [vmem:[#allocation7 + $0x18] sm:$0xff]
        %v1152 = vld [vmem:[#allocation7 + $0x20] sm:$0xff]
        %v1153 = vld [vmem:[#allocation7 + $0x28] sm:$0xff]
        %v1154 = vld [vmem:[#allocation7 + $0x30] sm:$0xff]
        %v1155 = vld [vmem:[#allocation7 + $0x38] sm:$0xff]
        %v1156 = vld [vmem:[#allocation7 + $0x40] sm:$0xff]
        %v1157 = vld [vmem:[#allocation7 + $0x48] sm:$0xff]
        %v1158 = vld [vmem:[#allocation7 + $0x50] sm:$0xff]
        %v1159 = vld [vmem:[#allocation7 + $0x58] sm:$0xff]
        %v1160 = vld [vmem:[#allocation7 + $0x60] sm:$0xff]
        %v1161 = vld [vmem:[#allocation7 + $0x68] sm:$0xff]
        %v1162 = vld [vmem:[#allocation7 + $0x70] sm:$0xff]
        %v1163 = vld [vmem:[#allocation7 + $0x78] sm:$0xff]
        %v1164 = vld [vmem:[#allocation7 + $0x80] sm:$0xff]
        %v1165 = vld [vmem:[#allocation7 + $0x88] sm:$0xff]
        %v1166 = vld [vmem:[#allocation7 + $0x90] sm:$0xff]
        %v1167 = vld [vmem:[#allocation7 + $0x98] sm:$0xff]
        %v1168 = vld [vmem:[#allocation7 + $0xa0] sm:$0xff]
        %v1169 = vld [vmem:[#allocation7 + $0xa8] sm:$0xff]
        %v1170 = vld [vmem:[#allocation7 + $0xb0] sm:$0xff]
        %v1171 = vld [vmem:[#allocation7 + $0xb8] sm:$0xff]
        %v1172 = vld [vmem:[#allocation7 + $0xc0] sm:$0xff]
        %v1173 = vld [vmem:[#allocation7 + $0xc8] sm:$0xff]
        %v1174 = vld [vmem:[#allocation7 + $0xd0] sm:$0xff]
        %v1175 = vld [vmem:[#allocation7 + $0xd8] sm:$0xff]
        %v1176 = vld [vmem:[#allocation7 + $0xe0] sm:$0xff]
        %v1177 = vld [vmem:[#allocation7 + $0xe8] sm:$0xff]
        %v1178 = vld [vmem:[#allocation7 + $0xf0] sm:$0xff]
        %v1179 = vld [vmem:[#allocation7 + $0xf8] sm:$0xff]
        %v1180 = vld [vmem:[#allocation7 + $0x100] sm:$0xff]
        %v1181 = vld [vmem:[#allocation7 + $0x108] sm:$0xff]
        %v1182 = vld [vmem:[#allocation7 + $0x110] sm:$0xff]
        %v1183 = vld [vmem:[#allocation7 + $0x118] sm:$0xff]
        %v1184 = vld [vmem:[%s2] sm:$0x1]
        %v1186 = vlaneseq
        %v1187 = vshrl.u32 %v1186, 7
        %v1188 = vsub.s32 0, %v1187
        %v1189 = vrot.slane %v1184, %v1188
        %v1191 = vsel %vm1025, %v641, 0
        %v1193 = vsel %vm1025, %v643, 0
        %v1195 = vsel %vm1025, %v646, 0
        %v1197 = vsel %vm1025, %v648, 0
        %v1199 = vsel %vm1025, %v651, 0
        %v1201 = vsel %vm1025, %v653, 0
        %v1203 = vsel %vm1025, %v656, 0
        %v1205 = vsel %vm1025, %v658, 0
        %v1207 = vsel %vm1025, %v661, 0
        %v1209 = vsel %vm1025, %v663, 0
        %v1211 = vsel %vm1025, %v666, 0
        %v1213 = vsel %vm1025, %v668, 0
        %v1215 = vsel %vm1025, %v671, 0
        %v1217 = vsel %vm1025, %v673, 0
        %v1219 = vsel %vm1025, %v676, 0
        %v1221 = vsel %vm1025, %v678, 0
        %v1223 = vsel %vm1025, %v829, 0
        %v1225 = vsel %vm1025, %v831, 0
        %v1227 = vsel %vm1025, %v1022, 0
        %v1229 = vsel %vm1025, %v1024, 0
        %1231 = vmatprep.subr.mxu0 0.0
        %1232 = vmatpush1.msra.mxu0 %v1163
        %1233 = vmatprep.subr.mxu0 0.0
        %1234 = vmatpush1.msra.mxu0 %v1162
        %1235 = vmatprep.subr.mxu0 0.0
        %1236 = vmatpush1.msra.mxu0 %v1161
        %1237 = vmatprep.subr.mxu0 0.0
        %1238 = vmatpush1.msra.mxu0 %v1160
        %1239 = vmatprep.subr.mxu0 0.0
        %1240 = vmatpush1.msra.mxu0 %v1159
        %1241 = vmatprep.subr.mxu0 0.0
        %1242 = vmatpush1.msra.mxu0 %v1158
        %1243 = vmatprep.subr.mxu0 0.0
        %1244 = vmatpush1.msra.mxu0 %v1157
        %1245 = vmatprep.subr.mxu0 0.0
        %1246 = vmatpush1.msra.mxu0 %v1156
        %1247 = vmatprep.subr.mxu0 0.0
        %1248 = vmatpush1.msra.mxu0 %v1155
        %1249 = vmatprep.subr.mxu0 0.0
        %1250 = vmatpush1.msra.mxu0 %v1154
        %1251 = vmatprep.subr.mxu0 0.0
        %1252 = vmatpush1.msra.mxu0 %v1153
        %1253 = vmatprep.subr.mxu0 0.0
        %1254 = vmatpush1.msra.mxu0 %v1152
        %1255 = vmatprep.subr.mxu0 0.0
        %1256 = vmatpush1.msra.mxu0 %v1151
        %1257 = vmatprep.subr.mxu0 0.0
        %1258 = vmatpush1.msra.mxu0 %v1150
        %1259 = vmatprep.subr.mxu0 0.0
        %1260 = vmatpush1.msra.mxu0 %v1149
        %1261 = vmatprep.subr.mxu0 0.0
        %1262 = vmatpush1.msra.mxu0 %v1148
        %1263 = vmatprep.subr.mxu0 0.0
        %1264 = vmatpush2.msra.mxu0 %v1179
        %1265 = vmatprep.subr.mxu0 0.0
        %1266 = vmatpush2.msra.mxu0 %v1178
        %1267 = vmatprep.subr.mxu0 0.0
        %1268 = vmatpush2.msra.mxu0 %v1177
        %1269 = vmatprep.subr.mxu0 0.0
        %1270 = vmatpush2.msra.mxu0 %v1176
        %1271 = vmatprep.subr.mxu0 0.0
        %1272 = vmatpush2.msra.mxu0 %v1175
        %1273 = vmatprep.subr.mxu0 0.0
        %1274 = vmatpush2.msra.mxu0 %v1174
        %1275 = vmatprep.subr.mxu0 0.0
        %1276 = vmatpush2.msra.mxu0 %v1173
        %1277 = vmatprep.subr.mxu0 0.0
        %1278 = vmatpush2.msra.mxu0 %v1172
        %1279 = vmatprep.subr.mxu0 0.0
        %1280 = vmatpush2.msra.mxu0 %v1171
        %1281 = vmatprep.subr.mxu0 0.0
        %1282 = vmatpush2.msra.mxu0 %v1170
        %1283 = vmatprep.subr.mxu0 0.0
        %1284 = vmatpush2.msra.mxu0 %v1169
        %1285 = vmatprep.subr.mxu0 0.0
        %1286 = vmatpush2.msra.mxu0 %v1168
        %1287 = vmatprep.subr.mxu0 0.0
        %1288 = vmatpush2.msra.mxu0 %v1167
        %1289 = vmatprep.subr.mxu0 0.0
        %1290 = vmatpush2.msra.mxu0 %v1166
        %1291 = vmatprep.subr.mxu0 0.0
        %1292 = vmatpush2.msra.mxu0 %v1165
        %1293 = vmatprep.subr.mxu0 0.0
        %1294 = vmatpush2.msra.mxu0 %v1164
        %1295 = vmatprep.mubr.f32.mxu0 %v1128
        %1296 = vmatmul.mubr.f32.gmra.mxu0 %v1068
        %v1297 = vpop.f32.mrf.mxu0
        %v1298 = vadd.f32 %v1189, %v1297
        %v1299 = vpop.f32.mrf.mxu0
        %1300 = vmatprep.mubr.f32.mxu0 %v1129
        %1301 = vmatmul.mubr.f32.gmra.mxu0 %v1069
        %v1302 = vpop.f32.mrf.mxu0
        %v1303 = vadd.f32 %v1189, %v1302
        %v1304 = vpop.f32.mrf.mxu0
        %1305 = vmatprep.mubr.f32.mxu0 %v1130
        %1306 = vmatmul.mubr.f32.gmra.mxu0 %v1070
        %v1307 = vpop.f32.mrf.mxu0
        %v1308 = vadd.f32 %v1189, %v1307
        %v1309 = vpop.f32.mrf.mxu0
        %1310 = vmatprep.mubr.f32.mxu0 %v1131
        %1311 = vmatmul.mubr.f32.gmra.mxu0 %v1071
        %v1312 = vpop.f32.mrf.mxu0
        %v1313 = vadd.f32 %v1189, %v1312
        %v1314 = vpop.f32.mrf.mxu0
        %1315 = vmatprep.mubr.f32.mxu0 %v1132
        %1316 = vmatmul.mubr.f32.gmra.mxu0 %v1072
        %v1317 = vpop.f32.mrf.mxu0
        %v1318 = vadd.f32 %v1189, %v1317
        %v1319 = vpop.f32.mrf.mxu0
        %1320 = vmatprep.mubr.f32.mxu0 %v1133
        %1321 = vmatmul.mubr.f32.gmra.mxu0 %v1073
        %v1322 = vpop.f32.mrf.mxu0
        %v1323 = vadd.f32 %v1189, %v1322
        %v1324 = vpop.f32.mrf.mxu0
        %1325 = vmatprep.mubr.f32.mxu0 %v1134
        %1326 = vmatmul.mubr.f32.gmra.mxu0 %v1074
        %v1327 = vpop.f32.mrf.mxu0
        %v1328 = vadd.f32 %v1189, %v1327
        %v1329 = vpop.f32.mrf.mxu0
        %1330 = vmatprep.mubr.f32.mxu0 %v1135
        %1331 = vmatmul.mubr.f32.gmra.mxu0 %v1075
        %v1332 = vpop.f32.mrf.mxu0
        %v1333 = vadd.f32 %v1189, %v1332
        %v1334 = vpop.f32.mrf.mxu0
        %1335 = vmatprep.mubr.f32.mxu0 %v1136
        %1336 = vmatmul.mubr.f32.gmra.mxu0 %v1076
        %v1337 = vpop.f32.mrf.mxu0
        %v1338 = vadd.f32 %v1189, %v1337
        %v1339 = vpop.f32.mrf.mxu0
        %1340 = vmatprep.mubr.f32.mxu0 %v1137
        %1341 = vmatmul.mubr.f32.gmra.mxu0 %v1077
        %v1342 = vpop.f32.mrf.mxu0
        %v1343 = vadd.f32 %v1189, %v1342
        %v1344 = vpop.f32.mrf.mxu0
        %1345 = vmatprep.mubr.f32.mxu0 %v1138
        %1346 = vmatmul.mubr.f32.gmra.mxu0 %v1078
        %v1347 = vpop.f32.mrf.mxu0
        %v1348 = vadd.f32 %v1189, %v1347
        %v1349 = vpop.f32.mrf.mxu0
        %1350 = vmatprep.mubr.f32.mxu0 %v1139
        %1351 = vmatmul.mubr.f32.gmra.mxu0 %v1079
        %v1352 = vpop.f32.mrf.mxu0
        %v1353 = vadd.f32 %v1189, %v1352
        %v1354 = vpop.f32.mrf.mxu0
        %1355 = vmatprep.mubr.f32.mxu0 %v1140
        %1356 = vmatmul.mubr.f32.gmra.mxu0 %v1080
        %v1357 = vpop.f32.mrf.mxu0
        %v1358 = vadd.f32 %v1189, %v1357
        %v1359 = vpop.f32.mrf.mxu0
        %1360 = vmatprep.mubr.f32.mxu0 %v1141
        %1361 = vmatmul.mubr.f32.gmra.mxu0 %v1081
        %v1362 = vpop.f32.mrf.mxu0
        %v1363 = vadd.f32 %v1189, %v1362
        %v1364 = vpop.f32.mrf.mxu0
        %1365 = vmatprep.mubr.f32.mxu0 %v1142
        %1366 = vmatmul.mubr.f32.gmra.mxu0 %v1082
        %v1367 = vpop.f32.mrf.mxu0
        %v1368 = vadd.f32 %v1189, %v1367
        %v1369 = vpop.f32.mrf.mxu0
        %1370 = vmatprep.mubr.f32.mxu0 %v1143
        %1371 = vmatmul.mubr.f32.gmra.mxu0 %v1083
        %v1372 = vpop.f32.mrf.mxu0
        %v1373 = vadd.f32 %v1189, %v1372
        %v1374 = vpop.f32.mrf.mxu0
        %1375 = vmatprep.mubr.f32.mxu0 %v1144
        %1376 = vmatmul.mubr.f32.gmra.mxu0 %v1084
        %v1377 = vpop.f32.mrf.mxu0
        %v1378 = vadd.f32 %v1189, %v1377
        %v1379 = vpop.f32.mrf.mxu0
        %1380 = vmatprep.mubr.f32.mxu0 %v1145
        %1381 = vmatmul.mubr.f32.gmra.mxu0 %v1085
        %v1382 = vpop.f32.mrf.mxu0
        %v1383 = vadd.f32 %v1189, %v1382
        %v1384 = vpop.f32.mrf.mxu0
        %1385 = vmatprep.mubr.f32.mxu0 %v1146
        %1386 = vmatmul.mubr.f32.gmra.mxu0 %v1086
        %v1387 = vpop.f32.mrf.mxu0
        %v1388 = vadd.f32 %v1189, %v1387
        %v1389 = vpop.f32.mrf.mxu0
        %1390 = vmatprep.mubr.f32.mxu0 %v1147
        %1391 = vmatmul.mubr.f32.gmra.mxu0 %v1087
        %v1392 = vpop.f32.mrf.mxu0
        %v1393 = vadd.f32 %v1189, %v1392
        %v1394 = vpop.f32.mrf.mxu0
        %1395 = vdwg.mxu0
        %1396 = vmatprep.subr.mxu0 0.0
        %1397 = vmatpush1.msra.mxu0 0.0
        %1398 = vmatprep.subr.mxu0 0.0
        %1399 = vmatpush1.msra.mxu0 0.0
        %1400 = vmatprep.subr.mxu0 0.0
        %1401 = vmatpush1.msra.mxu0 0.0
        %1402 = vmatprep.subr.mxu0 0.0
        %1403 = vmatpush1.msra.mxu0 0.0
        %1404 = vmatprep.subr.mxu0 0.0
        %1405 = vmatpush1.msra.mxu0 0.0
        %1406 = vmatprep.subr.mxu0 0.0
        %1407 = vmatpush1.msra.mxu0 0.0
        %1408 = vmatprep.subr.mxu0 0.0
        %1409 = vmatpush1.msra.mxu0 0.0
        %1410 = vmatprep.subr.mxu0 0.0
        %1411 = vmatpush1.msra.mxu0 0.0
        %1412 = vmatprep.subr.mxu0 0.0
        %1413 = vmatpush1.msra.mxu0 0.0
        %1414 = vmatprep.subr.mxu0 0.0
        %1415 = vmatpush1.msra.mxu0 0.0
        %1416 = vmatprep.subr.mxu0 0.0
        %1417 = vmatpush1.msra.mxu0 0.0
        %1418 = vmatprep.subr.mxu0 0.0
        %1419 = vmatpush1.msra.mxu0 0.0
        %1420 = vmatprep.subr.mxu0 0.0
        %1421 = vmatpush1.msra.mxu0 %v1183
        %1422 = vmatprep.subr.mxu0 0.0
        %1423 = vmatpush1.msra.mxu0 %v1182
        %1424 = vmatprep.subr.mxu0 0.0
        %1425 = vmatpush1.msra.mxu0 %v1181
        %1426 = vmatprep.subr.mxu0 0.0
        %1427 = vmatpush1.msra.mxu0 %v1180
        %1428 = vmatprep.subr.mxu0 0.0
        %1429 = vmatpush2.msra.mxu0 0.0
        %1430 = vmatprep.subr.mxu0 0.0
        %1431 = vmatpush2.msra.mxu0 0.0
        %1432 = vmatprep.subr.mxu0 0.0
        %1433 = vmatpush2.msra.mxu0 0.0
        %1434 = vmatprep.subr.mxu0 0.0
        %1435 = vmatpush2.msra.mxu0 0.0
        %1436 = vmatprep.subr.mxu0 0.0
        %1437 = vmatpush2.msra.mxu0 0.0
        %1438 = vmatprep.subr.mxu0 0.0
        %1439 = vmatpush2.msra.mxu0 0.0
        %1440 = vmatprep.subr.mxu0 0.0
        %1441 = vmatpush2.msra.mxu0 0.0
        %1442 = vmatprep.subr.mxu0 0.0
        %1443 = vmatpush2.msra.mxu0 0.0
        %1444 = vmatprep.subr.mxu0 0.0
        %1445 = vmatpush2.msra.mxu0 0.0
        %1446 = vmatprep.subr.mxu0 0.0
        %1447 = vmatpush2.msra.mxu0 0.0
        %1448 = vmatprep.subr.mxu0 0.0
        %1449 = vmatpush2.msra.mxu0 0.0
        %1450 = vmatprep.subr.mxu0 0.0
        %1451 = vmatpush2.msra.mxu0 0.0
        %1452 = vmatprep.subr.mxu0 0.0
        %1453 = vmatpush2.msra.mxu0 0.0
        %1454 = vmatprep.subr.mxu0 0.0
        %1455 = vmatpush2.msra.mxu0 0.0
        %1456 = vmatprep.subr.mxu0 0.0
        %1457 = vmatpush2.msra.mxu0 0.0
        %1458 = vmatprep.subr.mxu0 0.0
        %1459 = vmatpush2.msra.mxu0 0.0
        %1460 = vmatprep.mubr.f32.mxu0 0.0
        %1461 = vmatmul.mubr.f32.gmra.mxu0 %v1191
        %v1462 = vpop.f32.mrf.mxu0
        %v1463 = vadd.f32 %v1298, %v1462
        %v1464 = vpop.f32.mrf.mxu0
        %1465 = vmatprep.mubr.f32.mxu0 0.0
        %1466 = vmatmul.mubr.f32.gmra.mxu0 %v1193
        %v1467 = vpop.f32.mrf.mxu0
        %v1468 = vadd.f32 %v1303, %v1467
        %v1469 = vpop.f32.mrf.mxu0
        %1470 = vmatprep.mubr.f32.mxu0 0.0
        %1471 = vmatmul.mubr.f32.gmra.mxu0 %v1195
        %v1472 = vpop.f32.mrf.mxu0
        %v1473 = vadd.f32 %v1308, %v1472
        %v1474 = vpop.f32.mrf.mxu0
        %1475 = vmatprep.mubr.f32.mxu0 0.0
        %1476 = vmatmul.mubr.f32.gmra.mxu0 %v1197
        %v1477 = vpop.f32.mrf.mxu0
        %v1478 = vadd.f32 %v1313, %v1477
        %v1479 = vpop.f32.mrf.mxu0
        %1480 = vmatprep.mubr.f32.mxu0 0.0
        %1481 = vmatmul.mubr.f32.gmra.mxu0 %v1199
        %v1482 = vpop.f32.mrf.mxu0
        %v1483 = vadd.f32 %v1318, %v1482
        %v1484 = vpop.f32.mrf.mxu0
        %1485 = vmatprep.mubr.f32.mxu0 0.0
        %1486 = vmatmul.mubr.f32.gmra.mxu0 %v1201
        %v1487 = vpop.f32.mrf.mxu0
        %v1488 = vadd.f32 %v1323, %v1487
        %v1489 = vpop.f32.mrf.mxu0
        %1490 = vmatprep.mubr.f32.mxu0 0.0
        %1491 = vmatmul.mubr.f32.gmra.mxu0 %v1203
        %v1492 = vpop.f32.mrf.mxu0
        %v1493 = vadd.f32 %v1328, %v1492
        %v1494 = vpop.f32.mrf.mxu0
        %1495 = vmatprep.mubr.f32.mxu0 0.0
        %1496 = vmatmul.mubr.f32.gmra.mxu0 %v1205
        %v1497 = vpop.f32.mrf.mxu0
        %v1498 = vadd.f32 %v1333, %v1497
        %v1499 = vpop.f32.mrf.mxu0
        %1500 = vmatprep.mubr.f32.mxu0 0.0
        %1501 = vmatmul.mubr.f32.gmra.mxu0 %v1207
        %v1502 = vpop.f32.mrf.mxu0
        %v1503 = vadd.f32 %v1338, %v1502
        %v1504 = vpop.f32.mrf.mxu0
        %1505 = vmatprep.mubr.f32.mxu0 0.0
        %1506 = vmatmul.mubr.f32.gmra.mxu0 %v1209
        %v1507 = vpop.f32.mrf.mxu0
        %v1508 = vadd.f32 %v1343, %v1507
        %v1509 = vpop.f32.mrf.mxu0
        %1510 = vmatprep.mubr.f32.mxu0 0.0
        %1511 = vmatmul.mubr.f32.gmra.mxu0 %v1211
        %v1512 = vpop.f32.mrf.mxu0
        %v1513 = vadd.f32 %v1348, %v1512
        %v1514 = vpop.f32.mrf.mxu0
        %1515 = vmatprep.mubr.f32.mxu0 0.0
        %1516 = vmatmul.mubr.f32.gmra.mxu0 %v1213
        %v1517 = vpop.f32.mrf.mxu0
        %v1518 = vadd.f32 %v1353, %v1517
        %v1519 = vpop.f32.mrf.mxu0
        %1520 = vmatprep.mubr.f32.mxu0 0.0
        %1521 = vmatmul.mubr.f32.gmra.mxu0 %v1215
        %v1522 = vpop.f32.mrf.mxu0
        %v1523 = vadd.f32 %v1358, %v1522
        %v1524 = vpop.f32.mrf.mxu0
        %1525 = vmatprep.mubr.f32.mxu0 0.0
        %1526 = vmatmul.mubr.f32.gmra.mxu0 %v1217
        %v1527 = vpop.f32.mrf.mxu0
        %v1528 = vadd.f32 %v1363, %v1527
        %v1529 = vpop.f32.mrf.mxu0
        %1530 = vmatprep.mubr.f32.mxu0 0.0
        %1531 = vmatmul.mubr.f32.gmra.mxu0 %v1219
        %v1532 = vpop.f32.mrf.mxu0
        %v1533 = vadd.f32 %v1368, %v1532
        %v1534 = vpop.f32.mrf.mxu0
        %1535 = vmatprep.mubr.f32.mxu0 0.0
        %1536 = vmatmul.mubr.f32.gmra.mxu0 %v1221
        %v1537 = vpop.f32.mrf.mxu0
        %v1538 = vadd.f32 %v1373, %v1537
        %v1539 = vpop.f32.mrf.mxu0
        %1540 = vmatprep.mubr.f32.mxu0 0.0
        %1541 = vmatmul.mubr.f32.gmra.mxu0 %v1223
        %v1542 = vpop.f32.mrf.mxu0
        %v1543 = vadd.f32 %v1378, %v1542
        %v1544 = vpop.f32.mrf.mxu0
        %1545 = vmatprep.mubr.f32.mxu0 0.0
        %1546 = vmatmul.mubr.f32.gmra.mxu0 %v1225
        %v1547 = vpop.f32.mrf.mxu0
        %v1548 = vadd.f32 %v1383, %v1547
        %v1549 = vpop.f32.mrf.mxu0
        %1550 = vmatprep.mubr.f32.mxu0 0.0
        %1551 = vmatmul.mubr.f32.gmra.mxu0 %v1227
        %v1552 = vpop.f32.mrf.mxu0
        %v1553 = vadd.f32 %v1388, %v1552
        %v1554 = vpop.f32.mrf.mxu0
        %1555 = vmatprep.mubr.f32.mxu0 0.0
        %1556 = vmatmul.mubr.f32.gmra.mxu0 %v1229
        %v1557 = vpop.f32.mrf.mxu0
        %v1558 = vadd.f32 %v1393, %v1557
        %v1559 = vpop.f32.mrf.mxu0
        %1560 = vdwg.mxu0
        %v1561 = vmax.f32 %v1463, 0.0
        %v1562 = vmax.f32 %v1468, 0.0
        %v1563 = vmax.f32 %v1473, 0.0
        %v1564 = vmax.f32 %v1478, 0.0
        %v1565 = vmax.f32 %v1483, 0.0
        %v1566 = vmax.f32 %v1488, 0.0
        %v1567 = vmax.f32 %v1493, 0.0
        %v1568 = vmax.f32 %v1498, 0.0
        %v1569 = vmax.f32 %v1503, 0.0
        %v1570 = vmax.f32 %v1508, 0.0
        %v1571 = vmax.f32 %v1513, 0.0
        %v1572 = vmax.f32 %v1518, 0.0
        %v1573 = vmax.f32 %v1523, 0.0
        %v1574 = vmax.f32 %v1528, 0.0
        %v1575 = vmax.f32 %v1533, 0.0
        %v1576 = vmax.f32 %v1538, 0.0
        %v1577 = vmax.f32 %v1543, 0.0
        %v1578 = vmax.f32 %v1548, 0.0
        %v1579 = vmax.f32 %v1553, 0.0
        %v1580 = vmax.f32 %v1558, 0.0
        %1581 = vst.msk [vmem:[#allocation3 + $0x1] sm:$0xff] %vm1025, %v1561
        %1582 = vst.msk [vmem:[#allocation3 + $0x9] sm:$0xff] %vm1025, %v1562
        %1583 = vst.msk [vmem:[#allocation3 + $0x19] sm:$0xff] %vm1025, %v1563
        %1584 = vst.msk [vmem:[#allocation3 + $0x21] sm:$0xff] %vm1025, %v1564
        %1585 = vst.msk [vmem:[#allocation3 + $0x31] sm:$0xff] %vm1025, %v1565
        %1586 = vst.msk [vmem:[#allocation3 + $0x39] sm:$0xff] %vm1025, %v1566
        %1587 = vst.msk [vmem:[#allocation3 + $0x49] sm:$0xff] %vm1025, %v1567
        %1588 = vst.msk [vmem:[#allocation3 + $0x51] sm:$0xff] %vm1025, %v1568
        %1589 = vst.msk [vmem:[#allocation3 + $0x61] sm:$0xff] %vm1025, %v1569
        %1590 = vst.msk [vmem:[#allocation3 + $0x69] sm:$0xff] %vm1025, %v1570
        %1591 = vst.msk [vmem:[#allocation3 + $0x79] sm:$0xff] %vm1025, %v1571
        %1592 = vst.msk [vmem:[#allocation3 + $0x81] sm:$0xff] %vm1025, %v1572
        %1593 = vst.msk [vmem:[#allocation3 + $0x91] sm:$0xff] %vm1025, %v1573
        %1594 = vst.msk [vmem:[#allocation3 + $0x99] sm:$0xff] %vm1025, %v1574
        %1595 = vst.msk [vmem:[#allocation3 + $0xa9] sm:$0xff] %vm1025, %v1575
        %1596 = vst.msk [vmem:[#allocation3 + $0xb1] sm:$0xff] %vm1025, %v1576
        %1597 = vst.msk [vmem:[#allocation3 + $0xc1] sm:$0xff] %vm1025, %v1577
        %1598 = vst.msk [vmem:[#allocation3 + $0xc9] sm:$0xff] %vm1025, %v1578
        %1599 = vst.msk [vmem:[#allocation3 + $0xd9] sm:$0xff] %vm1025, %v1579
        %1600 = vst.msk [vmem:[#allocation3 + $0xe1] sm:$0xff] %vm1025, %v1580
        %p1601 = scmp.eq.s32.totalorder %s287, 0
        // Predicated region
        $region57: #{basic_conv_nchw.1} parent=39 // pred_check
          %p1602 = pneg %p1601
        $region58: #{basic_conv_nchw.1} parent=39 // pred_check_branch
          %1604 = sbr.rel (%p1602) target = $region60
        $region59: #{basic_conv_nchw.1} parent=39 // pred_region
          %1605 = vst.msk [vmem:[#allocation3] sm:$0xff] %vm1025, 0.0
          %1606 = vst.msk [vmem:[#allocation3 + $0x8] sm:$0xff] %vm1025, 0.0
          %vm1607 = vcmask 254976
          %1608 = vst.msk [vmem:[#allocation3 + $0x10] sm:$0x3] %vm1607, 0.0
        $region60: #{basic_conv_nchw.1} parent=39 // pred_fallthru
          _
        %s1609 = sadd.s32 %s287, 8
        %p1610 = scmp.eq.s32.totalorder %s1609, 16
        // Predicated region
        $region61: #{basic_conv_nchw.1} parent=39 // pred_check
          %p1611 = pneg %p1610
        $region62: #{basic_conv_nchw.1} parent=39 // pred_check_branch
          %1613 = sbr.rel (%p1611) target = $region64
        $region63: #{basic_conv_nchw.1} parent=39 // pred_region
          %s1614 = scalar_lea.vmem [#allocation3], 216
          %1615 = vst.msk [vmem:[%s1614] sm:$0xff] %vm1025, 0.0
          %1616 = vst.msk [vmem:[%s1614 + $0x8] sm:$0xff] %vm1025, 0.0
          %vm1617 = vcmask 254976
          %1618 = vst.msk [vmem:[%s1614 + $0x10] sm:$0x3] %vm1617, 0.0
        $region64: #{basic_conv_nchw.1} parent=39 // pred_fallthru
          _
        %v1619 = vld [vmem:[#allocation3] sm:$0xff]
        %v1620 = vld [vmem:[#allocation3 + $0x8] sm:$0xff]
        %v1621 = vld [vmem:[#allocation3 + $0x18] sm:$0xff]
        %v1622 = vld [vmem:[#allocation3 + $0x20] sm:$0xff]
        %v1623 = vld [vmem:[#allocation3 + $0x30] sm:$0xff]
        %v1624 = vld [vmem:[#allocation3 + $0x38] sm:$0xff]
        %v1625 = vld [vmem:[#allocation3 + $0x48] sm:$0xff]
        %v1626 = vld [vmem:[#allocation3 + $0x50] sm:$0xff]
        %v1627 = vld [vmem:[#allocation3 + $0x60] sm:$0xff]
        %v1628 = vld [vmem:[#allocation3 + $0x68] sm:$0xff]
        %v1629 = vld [vmem:[#allocation3 + $0x78] sm:$0xff]
        %v1630 = vld [vmem:[#allocation3 + $0x80] sm:$0xff]
        %v1631 = vld [vmem:[#allocation3 + $0x90] sm:$0xff]
        %v1632 = vld [vmem:[#allocation3 + $0x98] sm:$0xff]
        %v1633 = vld [vmem:[#allocation3 + $0xa8] sm:$0xff]
        %v1634 = vld [vmem:[#allocation3 + $0xb0] sm:$0xff]
        %v1635 = vld [vmem:[#allocation3 + $0x1] sm:$0xff]
        %v1636 = vld [vmem:[#allocation3 + $0x9] sm:$0xff]
        %v1637 = vld [vmem:[#allocation3 + $0x19] sm:$0xff]
        %v1638 = vld [vmem:[#allocation3 + $0x21] sm:$0xff]
        %v1639 = vld [vmem:[#allocation3 + $0x31] sm:$0xff]
        %v1640 = vld [vmem:[#allocation3 + $0x39] sm:$0xff]
        %v1641 = vld [vmem:[#allocation3 + $0x49] sm:$0xff]
        %v1642 = vld [vmem:[#allocation3 + $0x51] sm:$0xff]
        %v1643 = vld [vmem:[#allocation3 + $0x61] sm:$0xff]
        %v1644 = vld [vmem:[#allocation3 + $0x69] sm:$0xff]
        %v1645 = vld [vmem:[#allocation3 + $0x79] sm:$0xff]
        %v1646 = vld [vmem:[#allocation3 + $0x81] sm:$0xff]
        %v1647 = vld [vmem:[#allocation3 + $0x91] sm:$0xff]
        %v1648 = vld [vmem:[#allocation3 + $0x99] sm:$0xff]
        %v1649 = vld [vmem:[#allocation3 + $0xa9] sm:$0xff]
        %v1650 = vld [vmem:[#allocation3 + $0xb1] sm:$0xff]
        %v1651 = vld [vmem:[#allocation3 + $0x2] sm:$0xff]
        %v1652 = vld [vmem:[#allocation3 + $0xa] sm:$0xff]
        %v1653 = vld [vmem:[#allocation3 + $0x1a] sm:$0xff]
        %v1654 = vld [vmem:[#allocation3 + $0x22] sm:$0xff]
        %v1655 = vld [vmem:[#allocation3 + $0x32] sm:$0xff]
        %v1656 = vld [vmem:[#allocation3 + $0x3a] sm:$0xff]
        %v1657 = vld [vmem:[#allocation3 + $0x4a] sm:$0xff]
        %v1658 = vld [vmem:[#allocation3 + $0x52] sm:$0xff]
        %v1659 = vld [vmem:[#allocation3 + $0x62] sm:$0xff]
        %v1660 = vld [vmem:[#allocation3 + $0x6a] sm:$0xff]
        %v1661 = vld [vmem:[#allocation3 + $0x7a] sm:$0xff]
        %v1662 = vld [vmem:[#allocation3 + $0x82] sm:$0xff]
        %v1663 = vld [vmem:[#allocation3 + $0x92] sm:$0xff]
        %v1664 = vld [vmem:[#allocation3 + $0x9a] sm:$0xff]
        %v1665 = vld [vmem:[#allocation3 + $0xaa] sm:$0xff]
        %v1666 = vld [vmem:[#allocation3 + $0xb2] sm:$0xff]
        %s1667 = scalar_lea.vmem [#allocation3], 24
        %v1668 = vld [vmem:[%s1667] sm:$0xff]
        %v1669 = vld [vmem:[%s1667 + $0x8] sm:$0xff]
        %v1670 = vld [vmem:[%s1667 + $0x18] sm:$0xff]
        %v1671 = vld [vmem:[%s1667 + $0x20] sm:$0xff]
        %v1672 = vld [vmem:[%s1667 + $0x30] sm:$0xff]
        %v1673 = vld [vmem:[%s1667 + $0x38] sm:$0xff]
        %v1674 = vld [vmem:[%s1667 + $0x48] sm:$0xff]
        %v1675 = vld [vmem:[%s1667 + $0x50] sm:$0xff]
        %v1676 = vld [vmem:[%s1667 + $0x60] sm:$0xff]
        %v1677 = vld [vmem:[%s1667 + $0x68] sm:$0xff]
        %v1678 = vld [vmem:[%s1667 + $0x78] sm:$0xff]
        %v1679 = vld [vmem:[%s1667 + $0x80] sm:$0xff]
        %v1680 = vld [vmem:[%s1667 + $0x90] sm:$0xff]
        %v1681 = vld [vmem:[%s1667 + $0x98] sm:$0xff]
        %v1682 = vld [vmem:[%s1667 + $0xa8] sm:$0xff]
        %v1683 = vld [vmem:[%s1667 + $0xb0] sm:$0xff]
        %v1684 = vld [vmem:[%s1667 + $0x1] sm:$0xff]
        %v1685 = vld [vmem:[%s1667 + $0x9] sm:$0xff]
        %v1686 = vld [vmem:[%s1667 + $0x19] sm:$0xff]
        %v1687 = vld [vmem:[%s1667 + $0x21] sm:$0xff]
        %v1688 = vld [vmem:[%s1667 + $0x31] sm:$0xff]
        %v1689 = vld [vmem:[%s1667 + $0x39] sm:$0xff]
        %v1690 = vld [vmem:[%s1667 + $0x49] sm:$0xff]
        %v1691 = vld [vmem:[%s1667 + $0x51] sm:$0xff]
        %v1692 = vld [vmem:[%s1667 + $0x61] sm:$0xff]
        %v1693 = vld [vmem:[%s1667 + $0x69] sm:$0xff]
        %v1694 = vld [vmem:[%s1667 + $0x79] sm:$0xff]
        %v1695 = vld [vmem:[%s1667 + $0x81] sm:$0xff]
        %v1696 = vld [vmem:[%s1667 + $0x91] sm:$0xff]
        %v1697 = vld [vmem:[%s1667 + $0x99] sm:$0xff]
        %v1698 = vld [vmem:[%s1667 + $0xa9] sm:$0xff]
        %v1699 = vld [vmem:[%s1667 + $0xb1] sm:$0xff]
        %v1700 = vld [vmem:[%s1667 + $0x2] sm:$0xff]
        %v1701 = vld [vmem:[%s1667 + $0xa] sm:$0xff]
        %v1702 = vld [vmem:[%s1667 + $0x1a] sm:$0xff]
        %v1703 = vld [vmem:[%s1667 + $0x22] sm:$0xff]
        %v1704 = vld [vmem:[%s1667 + $0x32] sm:$0xff]
        %v1705 = vld [vmem:[%s1667 + $0x3a] sm:$0xff]
        %v1706 = vld [vmem:[%s1667 + $0x4a] sm:$0xff]
        %v1707 = vld [vmem:[%s1667 + $0x52] sm:$0xff]
        %v1708 = vld [vmem:[%s1667 + $0x62] sm:$0xff]
        %v1709 = vld [vmem:[%s1667 + $0x6a] sm:$0xff]
        %v1710 = vld [vmem:[%s1667 + $0x7a] sm:$0xff]
        %v1711 = vld [vmem:[%s1667 + $0x82] sm:$0xff]
        %v1712 = vld [vmem:[%s1667 + $0x92] sm:$0xff]
        %v1713 = vld [vmem:[%s1667 + $0x9a] sm:$0xff]
        %v1714 = vld [vmem:[%s1667 + $0xaa] sm:$0xff]
        %v1715 = vld [vmem:[%s1667 + $0xb2] sm:$0xff]
        %s1716 = scalar_lea.vmem [#allocation3], 48
        %v1717 = vld [vmem:[%s1716] sm:$0xff]
        %v1718 = vld [vmem:[%s1716 + $0x8] sm:$0xff]
        %v1719 = vld [vmem:[%s1716 + $0x18] sm:$0xff]
        %v1720 = vld [vmem:[%s1716 + $0x20] sm:$0xff]
        %v1721 = vld [vmem:[%s1716 + $0x30] sm:$0xff]
        %v1722 = vld [vmem:[%s1716 + $0x38] sm:$0xff]
        %v1723 = vld [vmem:[%s1716 + $0x48] sm:$0xff]
        %v1724 = vld [vmem:[%s1716 + $0x50] sm:$0xff]
        %v1725 = vld [vmem:[%s1716 + $0x60] sm:$0xff]
        %v1726 = vld [vmem:[%s1716 + $0x68] sm:$0xff]
        %v1727 = vld [vmem:[%s1716 + $0x78] sm:$0xff]
        %v1728 = vld [vmem:[%s1716 + $0x80] sm:$0xff]
        %v1729 = vld [vmem:[%s1716 + $0x90] sm:$0xff]
        %v1730 = vld [vmem:[%s1716 + $0x98] sm:$0xff]
        %v1731 = vld [vmem:[%s1716 + $0xa8] sm:$0xff]
        %v1732 = vld [vmem:[%s1716 + $0xb0] sm:$0xff]
        %v1733 = vld [vmem:[%s1716 + $0x1] sm:$0xff]
        %v1734 = vld [vmem:[%s1716 + $0x9] sm:$0xff]
        %v1735 = vld [vmem:[%s1716 + $0x19] sm:$0xff]
        %v1736 = vld [vmem:[%s1716 + $0x21] sm:$0xff]
        %v1737 = vld [vmem:[%s1716 + $0x31] sm:$0xff]
        %v1738 = vld [vmem:[%s1716 + $0x39] sm:$0xff]
        %v1739 = vld [vmem:[%s1716 + $0x49] sm:$0xff]
        %v1740 = vld [vmem:[%s1716 + $0x51] sm:$0xff]
        %v1741 = vld [vmem:[%s1716 + $0x61] sm:$0xff]
        %v1742 = vld [vmem:[%s1716 + $0x69] sm:$0xff]
        %v1743 = vld [vmem:[%s1716 + $0x79] sm:$0xff]
        %v1744 = vld [vmem:[%s1716 + $0x81] sm:$0xff]
        %v1745 = vld [vmem:[%s1716 + $0x91] sm:$0xff]
        %v1746 = vld [vmem:[%s1716 + $0x99] sm:$0xff]
        %v1747 = vld [vmem:[%s1716 + $0xa9] sm:$0xff]
        %v1748 = vld [vmem:[%s1716 + $0xb1] sm:$0xff]
        %v1749 = vld [vmem:[%s1716 + $0x2] sm:$0xff]
        %v1750 = vld [vmem:[%s1716 + $0xa] sm:$0xff]
        %v1751 = vld [vmem:[%s1716 + $0x1a] sm:$0xff]
        %v1752 = vld [vmem:[%s1716 + $0x22] sm:$0xff]
        %v1753 = vld [vmem:[%s1716 + $0x32] sm:$0xff]
        %v1754 = vld [vmem:[%s1716 + $0x3a] sm:$0xff]
        %v1755 = vld [vmem:[%s1716 + $0x4a] sm:$0xff]
        %v1756 = vld [vmem:[%s1716 + $0x52] sm:$0xff]
        %v1757 = vld [vmem:[%s1716 + $0x62] sm:$0xff]
        %v1758 = vld [vmem:[%s1716 + $0x6a] sm:$0xff]
        %v1759 = vld [vmem:[%s1716 + $0x7a] sm:$0xff]
        %v1760 = vld [vmem:[%s1716 + $0x82] sm:$0xff]
        %v1761 = vld [vmem:[%s1716 + $0x92] sm:$0xff]
        %v1762 = vld [vmem:[%s1716 + $0x9a] sm:$0xff]
        %v1763 = vld [vmem:[%s1716 + $0xaa] sm:$0xff]
        %v1764 = vld [vmem:[%s1716 + $0xb2] sm:$0xff]
        %1781 = vrot.lane.b32.xlu0 %v1635, 32
        %v1782 = vpop.permute.xlu0 %1781
        %1783 = vrot.lane.b32.xlu0 %v1636, 32
        %v1784 = vpop.permute.xlu0 %1783
        %1785 = vrot.lane.b32.xlu0 %v1637, 32
        %v1786 = vpop.permute.xlu0 %1785
        %1787 = vrot.lane.b32.xlu0 %v1638, 32
        %v1788 = vpop.permute.xlu0 %1787
        %1789 = vrot.lane.b32.xlu0 %v1639, 32
        %v1790 = vpop.permute.xlu0 %1789
        %1791 = vrot.lane.b32.xlu0 %v1640, 32
        %v1792 = vpop.permute.xlu0 %1791
        %1793 = vrot.lane.b32.xlu0 %v1641, 32
        %v1794 = vpop.permute.xlu0 %1793
        %1795 = vrot.lane.b32.xlu0 %v1642, 32
        %v1796 = vpop.permute.xlu0 %1795
        %1797 = vrot.lane.b32.xlu0 %v1643, 32
        %v1798 = vpop.permute.xlu0 %1797
        %1799 = vrot.lane.b32.xlu0 %v1644, 32
        %v1800 = vpop.permute.xlu0 %1799
        %1801 = vrot.lane.b32.xlu0 %v1645, 32
        %v1802 = vpop.permute.xlu0 %1801
        %1803 = vrot.lane.b32.xlu0 %v1646, 32
        %v1804 = vpop.permute.xlu0 %1803
        %1805 = vrot.lane.b32.xlu0 %v1647, 32
        %v1806 = vpop.permute.xlu0 %1805
        %1807 = vrot.lane.b32.xlu0 %v1648, 32
        %v1808 = vpop.permute.xlu0 %1807
        %1809 = vrot.lane.b32.xlu0 %v1649, 32
        %v1810 = vpop.permute.xlu0 %1809
        %1811 = vrot.lane.b32.xlu0 %v1650, 32
        %v1812 = vpop.permute.xlu0 %1811
        %1845 = vrot.lane.b32.xlu0 %v1651, 64
        %v1846 = vpop.permute.xlu0 %1845
        %1847 = vrot.lane.b32.xlu0 %v1652, 64
        %v1848 = vpop.permute.xlu0 %1847
        %1849 = vrot.lane.b32.xlu0 %v1653, 64
        %v1850 = vpop.permute.xlu0 %1849
        %1851 = vrot.lane.b32.xlu0 %v1654, 64
        %v1852 = vpop.permute.xlu0 %1851
        %1853 = vrot.lane.b32.xlu0 %v1655, 64
        %v1854 = vpop.permute.xlu0 %1853
        %1855 = vrot.lane.b32.xlu0 %v1656, 64
        %v1856 = vpop.permute.xlu0 %1855
        %1857 = vrot.lane.b32.xlu0 %v1657, 64
        %v1858 = vpop.permute.xlu0 %1857
        %1859 = vrot.lane.b32.xlu0 %v1658, 64
        %v1860 = vpop.permute.xlu0 %1859
        %1861 = vrot.lane.b32.xlu0 %v1659, 64
        %v1862 = vpop.permute.xlu0 %1861
        %1863 = vrot.lane.b32.xlu0 %v1660, 64
        %v1864 = vpop.permute.xlu0 %1863
        %1865 = vrot.lane.b32.xlu0 %v1661, 64
        %v1866 = vpop.permute.xlu0 %1865
        %1867 = vrot.lane.b32.xlu0 %v1662, 64
        %v1868 = vpop.permute.xlu0 %1867
        %1869 = vrot.lane.b32.xlu0 %v1663, 64
        %v1870 = vpop.permute.xlu0 %1869
        %1871 = vrot.lane.b32.xlu0 %v1664, 64
        %v1872 = vpop.permute.xlu0 %1871
        %1873 = vrot.lane.b32.xlu0 %v1665, 64
        %v1874 = vpop.permute.xlu0 %1873
        %1875 = vrot.lane.b32.xlu0 %v1666, 64
        %v1876 = vpop.permute.xlu0 %1875
        %1909 = vrot.lane.b32.xlu0 %v1668, 96
        %v1910 = vpop.permute.xlu0 %1909
        %1911 = vrot.lane.b32.xlu0 %v1669, 96
        %v1912 = vpop.permute.xlu0 %1911
        %1913 = vrot.lane.b32.xlu0 %v1670, 96
        %v1914 = vpop.permute.xlu0 %1913
        %1915 = vrot.lane.b32.xlu0 %v1671, 96
        %v1916 = vpop.permute.xlu0 %1915
        %1917 = vrot.lane.b32.xlu0 %v1672, 96
        %v1918 = vpop.permute.xlu0 %1917
        %1919 = vrot.lane.b32.xlu0 %v1673, 96
        %v1920 = vpop.permute.xlu0 %1919
        %1921 = vrot.lane.b32.xlu0 %v1674, 96
        %v1922 = vpop.permute.xlu0 %1921
        %1923 = vrot.lane.b32.xlu0 %v1675, 96
        %v1924 = vpop.permute.xlu0 %1923
        %1925 = vrot.lane.b32.xlu0 %v1676, 96
        %v1926 = vpop.permute.xlu0 %1925
        %1927 = vrot.lane.b32.xlu0 %v1677, 96
        %v1928 = vpop.permute.xlu0 %1927
        %1929 = vrot.lane.b32.xlu0 %v1678, 96
        %v1930 = vpop.permute.xlu0 %1929
        %1931 = vrot.lane.b32.xlu0 %v1679, 96
        %v1932 = vpop.permute.xlu0 %1931
        %1933 = vrot.lane.b32.xlu0 %v1680, 96
        %v1934 = vpop.permute.xlu0 %1933
        %1935 = vrot.lane.b32.xlu0 %v1681, 96
        %v1936 = vpop.permute.xlu0 %1935
        %1937 = vrot.lane.b32.xlu0 %v1682, 96
        %v1938 = vpop.permute.xlu0 %1937
        %1939 = vrot.lane.b32.xlu0 %v1683, 96
        %v1940 = vpop.permute.xlu0 %1939
        %1973 = vrot.lane.b32.xlu0 %v1700, 32
        %v1974 = vpop.permute.xlu0 %1973
        %1975 = vrot.lane.b32.xlu0 %v1701, 32
        %v1976 = vpop.permute.xlu0 %1975
        %1977 = vrot.lane.b32.xlu0 %v1702, 32
        %v1978 = vpop.permute.xlu0 %1977
        %1979 = vrot.lane.b32.xlu0 %v1703, 32
        %v1980 = vpop.permute.xlu0 %1979
        %1981 = vrot.lane.b32.xlu0 %v1704, 32
        %v1982 = vpop.permute.xlu0 %1981
        %1983 = vrot.lane.b32.xlu0 %v1705, 32
        %v1984 = vpop.permute.xlu0 %1983
        %1985 = vrot.lane.b32.xlu0 %v1706, 32
        %v1986 = vpop.permute.xlu0 %1985
        %1987 = vrot.lane.b32.xlu0 %v1707, 32
        %v1988 = vpop.permute.xlu0 %1987
        %1989 = vrot.lane.b32.xlu0 %v1708, 32
        %v1990 = vpop.permute.xlu0 %1989
        %1991 = vrot.lane.b32.xlu0 %v1709, 32
        %v1992 = vpop.permute.xlu0 %1991
        %1993 = vrot.lane.b32.xlu0 %v1710, 32
        %v1994 = vpop.permute.xlu0 %1993
        %1995 = vrot.lane.b32.xlu0 %v1711, 32
        %v1996 = vpop.permute.xlu0 %1995
        %1997 = vrot.lane.b32.xlu0 %v1712, 32
        %v1998 = vpop.permute.xlu0 %1997
        %1999 = vrot.lane.b32.xlu0 %v1713, 32
        %v2000 = vpop.permute.xlu0 %1999
        %2001 = vrot.lane.b32.xlu0 %v1714, 32
        %v2002 = vpop.permute.xlu0 %2001
        %2003 = vrot.lane.b32.xlu0 %v1715, 32
        %v2004 = vpop.permute.xlu0 %2003
        %2037 = vrot.lane.b32.xlu0 %v1717, 64
        %v2038 = vpop.permute.xlu0 %2037
        %2039 = vrot.lane.b32.xlu0 %v1718, 64
        %v2040 = vpop.permute.xlu0 %2039
        %2041 = vrot.lane.b32.xlu0 %v1719, 64
        %v2042 = vpop.permute.xlu0 %2041
        %2043 = vrot.lane.b32.xlu0 %v1720, 64
        %v2044 = vpop.permute.xlu0 %2043
        %2045 = vrot.lane.b32.xlu0 %v1721, 64
        %v2046 = vpop.permute.xlu0 %2045
        %2047 = vrot.lane.b32.xlu0 %v1722, 64
        %v2048 = vpop.permute.xlu0 %2047
        %2049 = vrot.lane.b32.xlu0 %v1723, 64
        %v2050 = vpop.permute.xlu0 %2049
        %2051 = vrot.lane.b32.xlu0 %v1724, 64
        %v2052 = vpop.permute.xlu0 %2051
        %2053 = vrot.lane.b32.xlu0 %v1725, 64
        %v2054 = vpop.permute.xlu0 %2053
        %2055 = vrot.lane.b32.xlu0 %v1726, 64
        %v2056 = vpop.permute.xlu0 %2055
        %2057 = vrot.lane.b32.xlu0 %v1727, 64
        %v2058 = vpop.permute.xlu0 %2057
        %2059 = vrot.lane.b32.xlu0 %v1728, 64
        %v2060 = vpop.permute.xlu0 %2059
        %2061 = vrot.lane.b32.xlu0 %v1729, 64
        %v2062 = vpop.permute.xlu0 %2061
        %2063 = vrot.lane.b32.xlu0 %v1730, 64
        %v2064 = vpop.permute.xlu0 %2063
        %2065 = vrot.lane.b32.xlu0 %v1731, 64
        %v2066 = vpop.permute.xlu0 %2065
        %2067 = vrot.lane.b32.xlu0 %v1732, 64
        %v2068 = vpop.permute.xlu0 %2067
        %2101 = vrot.lane.b32.xlu0 %v1733, 96
        %v2102 = vpop.permute.xlu0 %2101
        %2103 = vrot.lane.b32.xlu0 %v1734, 96
        %v2104 = vpop.permute.xlu0 %2103
        %2105 = vrot.lane.b32.xlu0 %v1735, 96
        %v2106 = vpop.permute.xlu0 %2105
        %2107 = vrot.lane.b32.xlu0 %v1736, 96
        %v2108 = vpop.permute.xlu0 %2107
        %2109 = vrot.lane.b32.xlu0 %v1737, 96
        %v2110 = vpop.permute.xlu0 %2109
        %2111 = vrot.lane.b32.xlu0 %v1738, 96
        %v2112 = vpop.permute.xlu0 %2111
        %2113 = vrot.lane.b32.xlu0 %v1739, 96
        %v2114 = vpop.permute.xlu0 %2113
        %2115 = vrot.lane.b32.xlu0 %v1740, 96
        %v2116 = vpop.permute.xlu0 %2115
        %2117 = vrot.lane.b32.xlu0 %v1741, 96
        %v2118 = vpop.permute.xlu0 %2117
        %2119 = vrot.lane.b32.xlu0 %v1742, 96
        %v2120 = vpop.permute.xlu0 %2119
        %2121 = vrot.lane.b32.xlu0 %v1743, 96
        %v2122 = vpop.permute.xlu0 %2121
        %2123 = vrot.lane.b32.xlu0 %v1744, 96
        %v2124 = vpop.permute.xlu0 %2123
        %2125 = vrot.lane.b32.xlu0 %v1745, 96
        %v2126 = vpop.permute.xlu0 %2125
        %2127 = vrot.lane.b32.xlu0 %v1746, 96
        %v2128 = vpop.permute.xlu0 %2127
        %2129 = vrot.lane.b32.xlu0 %v1747, 96
        %v2130 = vpop.permute.xlu0 %2129
        %2131 = vrot.lane.b32.xlu0 %v1748, 96
        %v2132 = vpop.permute.xlu0 %2131
        %v2149 = vsel %vm1025, %v1619, %v1782
        %v2150 = vsel %vm1025, %v1620, %v1784
        %v2151 = vsel %vm1025, %v1621, %v1786
        %v2152 = vsel %vm1025, %v1622, %v1788
        %v2153 = vsel %vm1025, %v1623, %v1790
        %v2154 = vsel %vm1025, %v1624, %v1792
        %v2155 = vsel %vm1025, %v1625, %v1794
        %v2156 = vsel %vm1025, %v1626, %v1796
        %v2157 = vsel %vm1025, %v1627, %v1798
        %v2158 = vsel %vm1025, %v1628, %v1800
        %v2159 = vsel %vm1025, %v1629, %v1802
        %v2160 = vsel %vm1025, %v1630, %v1804
        %v2161 = vsel %vm1025, %v1631, %v1806
        %v2162 = vsel %vm1025, %v1632, %v1808
        %v2163 = vsel %vm1025, %v1633, %v1810
        %v2164 = vsel %vm1025, %v1634, %v1812
        %v2165 = vsel %vm1046, %v2149, %v1846
        %v2166 = vsel %vm1046, %v2150, %v1848
        %v2167 = vsel %vm1046, %v2151, %v1850
        %v2168 = vsel %vm1046, %v2152, %v1852
        %v2169 = vsel %vm1046, %v2153, %v1854
        %v2170 = vsel %vm1046, %v2154, %v1856
        %v2171 = vsel %vm1046, %v2155, %v1858
        %v2172 = vsel %vm1046, %v2156, %v1860
        %v2173 = vsel %vm1046, %v2157, %v1862
        %v2174 = vsel %vm1046, %v2158, %v1864
        %v2175 = vsel %vm1046, %v2159, %v1866
        %v2176 = vsel %vm1046, %v2160, %v1868
        %v2177 = vsel %vm1046, %v2161, %v1870
        %v2178 = vsel %vm1046, %v2162, %v1872
        %v2179 = vsel %vm1046, %v2163, %v1874
        %v2180 = vsel %vm1046, %v2164, %v1876
        %v2181 = vsel %vm1067, %v2165, %v1910
        %v2182 = vsel %vm1067, %v2166, %v1912
        %v2183 = vsel %vm1067, %v2167, %v1914
        %v2184 = vsel %vm1067, %v2168, %v1916
        %v2185 = vsel %vm1067, %v2169, %v1918
        %v2186 = vsel %vm1067, %v2170, %v1920
        %v2187 = vsel %vm1067, %v2171, %v1922
        %v2188 = vsel %vm1067, %v2172, %v1924
        %v2189 = vsel %vm1067, %v2173, %v1926
        %v2190 = vsel %vm1067, %v2174, %v1928
        %v2191 = vsel %vm1067, %v2175, %v1930
        %v2192 = vsel %vm1067, %v2176, %v1932
        %v2193 = vsel %vm1067, %v2177, %v1934
        %v2194 = vsel %vm1067, %v2178, %v1936
        %v2195 = vsel %vm1067, %v2179, %v1938
        %v2196 = vsel %vm1067, %v2180, %v1940
        %v2197 = vsel %vm1025, %v1684, %v1974
        %v2198 = vsel %vm1025, %v1685, %v1976
        %v2199 = vsel %vm1025, %v1686, %v1978
        %v2200 = vsel %vm1025, %v1687, %v1980
        %v2201 = vsel %vm1025, %v1688, %v1982
        %v2202 = vsel %vm1025, %v1689, %v1984
        %v2203 = vsel %vm1025, %v1690, %v1986
        %v2204 = vsel %vm1025, %v1691, %v1988
        %v2205 = vsel %vm1025, %v1692, %v1990
        %v2206 = vsel %vm1025, %v1693, %v1992
        %v2207 = vsel %vm1025, %v1694, %v1994
        %v2208 = vsel %vm1025, %v1695, %v1996
        %v2209 = vsel %vm1025, %v1696, %v1998
        %v2210 = vsel %vm1025, %v1697, %v2000
        %v2211 = vsel %vm1025, %v1698, %v2002
        %v2212 = vsel %vm1025, %v1699, %v2004
        %v2213 = vsel %vm1046, %v2197, %v2038
        %v2214 = vsel %vm1046, %v2198, %v2040
        %v2215 = vsel %vm1046, %v2199, %v2042
        %v2216 = vsel %vm1046, %v2200, %v2044
        %v2217 = vsel %vm1046, %v2201, %v2046
        %v2218 = vsel %vm1046, %v2202, %v2048
        %v2219 = vsel %vm1046, %v2203, %v2050
        %v2220 = vsel %vm1046, %v2204, %v2052
        %v2221 = vsel %vm1046, %v2205, %v2054
        %v2222 = vsel %vm1046, %v2206, %v2056
        %v2223 = vsel %vm1046, %v2207, %v2058
        %v2224 = vsel %vm1046, %v2208, %v2060
        %v2225 = vsel %vm1046, %v2209, %v2062
        %v2226 = vsel %vm1046, %v2210, %v2064
        %v2227 = vsel %vm1046, %v2211, %v2066
        %v2228 = vsel %vm1046, %v2212, %v2068
        %v2229 = vsel %vm1067, %v2213, %v2102
        %v2230 = vsel %vm1067, %v2214, %v2104
        %v2231 = vsel %vm1067, %v2215, %v2106
        %v2232 = vsel %vm1067, %v2216, %v2108
        %v2233 = vsel %vm1067, %v2217, %v2110
        %v2234 = vsel %vm1067, %v2218, %v2112
        %v2235 = vsel %vm1067, %v2219, %v2114
        %v2236 = vsel %vm1067, %v2220, %v2116
        %v2237 = vsel %vm1067, %v2221, %v2118
        %v2238 = vsel %vm1067, %v2222, %v2120
        %v2239 = vsel %vm1067, %v2223, %v2122
        %v2240 = vsel %vm1067, %v2224, %v2124
        %v2241 = vsel %vm1067, %v2225, %v2126
        %v2242 = vsel %vm1067, %v2226, %v2128
        %v2243 = vsel %vm1067, %v2227, %v2130
        %v2244 = vsel %vm1067, %v2228, %v2132
        %v2245 = vld [vmem:[#allocation9] sm:$0xff]
        %v2246 = vld [vmem:[#allocation9 + $0x8] sm:$0xff]
        %v2247 = vld [vmem:[#allocation9 + $0x10] sm:$0xff]
        %v2248 = vld [vmem:[#allocation9 + $0x18] sm:$0xff]
        %v2249 = vld [vmem:[#allocation9 + $0x20] sm:$0xff]
        %v2250 = vld [vmem:[#allocation9 + $0x28] sm:$0xff]
        %v2251 = vld [vmem:[#allocation9 + $0x30] sm:$0xff]
        %v2252 = vld [vmem:[#allocation9 + $0x38] sm:$0xff]
        %v2253 = vld [vmem:[#allocation9 + $0x40] sm:$0xff]
        %v2254 = vld [vmem:[#allocation9 + $0x48] sm:$0xff]
        %v2255 = vld [vmem:[#allocation9 + $0x50] sm:$0xff]
        %v2256 = vld [vmem:[#allocation9 + $0x58] sm:$0xff]
        %v2257 = vld [vmem:[#allocation9 + $0x60] sm:$0xff]
        %v2258 = vld [vmem:[#allocation9 + $0x68] sm:$0xff]
        %v2259 = vld [vmem:[#allocation9 + $0x70] sm:$0xff]
        %v2260 = vld [vmem:[#allocation9 + $0x78] sm:$0xff]
        %v2261 = vld [vmem:[#allocation9 + $0x80] sm:$0xff]
        %v2262 = vld [vmem:[#allocation9 + $0x88] sm:$0xff]
        %v2263 = vld [vmem:[#allocation9 + $0x90] sm:$0xff]
        %v2264 = vld [vmem:[#allocation9 + $0x98] sm:$0xff]
        %v2265 = vld [vmem:[#allocation9 + $0xa0] sm:$0xff]
        %v2266 = vld [vmem:[#allocation9 + $0xa8] sm:$0xff]
        %v2267 = vld [vmem:[#allocation9 + $0xb0] sm:$0xff]
        %v2268 = vld [vmem:[#allocation9 + $0xb8] sm:$0xff]
        %v2269 = vld [vmem:[#allocation9 + $0xc0] sm:$0xff]
        %v2270 = vld [vmem:[#allocation9 + $0xc8] sm:$0xff]
        %v2271 = vld [vmem:[#allocation9 + $0xd0] sm:$0xff]
        %v2272 = vld [vmem:[#allocation9 + $0xd8] sm:$0xff]
        %v2273 = vld [vmem:[#allocation9 + $0xe0] sm:$0xff]
        %v2274 = vld [vmem:[#allocation9 + $0xe8] sm:$0xff]
        %v2275 = vld [vmem:[#allocation9 + $0xf0] sm:$0xff]
        %v2276 = vld [vmem:[#allocation9 + $0xf8] sm:$0xff]
        %v2277 = vld [vmem:[#allocation9 + $0x100] sm:$0xff]
        %v2278 = vld [vmem:[#allocation9 + $0x108] sm:$0xff]
        %v2279 = vld [vmem:[#allocation9 + $0x110] sm:$0xff]
        %v2280 = vld [vmem:[#allocation9 + $0x118] sm:$0xff]
        %v2281 = vld [vmem:[%s4] sm:$0x1]
        %v2283 = vlaneseq
        %v2284 = vshrl.u32 %v2283, 7
        %v2285 = vsub.s32 0, %v2284
        %v2286 = vrot.slane %v2281, %v2285
        %v2289 = vsel %vm1025, %v1749, 0
        %v2292 = vsel %vm1025, %v1750, 0
        %v2295 = vsel %vm1025, %v1751, 0
        %v2298 = vsel %vm1025, %v1752, 0
        %v2301 = vsel %vm1025, %v1753, 0
        %v2304 = vsel %vm1025, %v1754, 0
        %v2307 = vsel %vm1025, %v1755, 0
        %v2310 = vsel %vm1025, %v1756, 0
        %v2313 = vsel %vm1025, %v1757, 0
        %v2316 = vsel %vm1025, %v1758, 0
        %v2319 = vsel %vm1025, %v1759, 0
        %v2322 = vsel %vm1025, %v1760, 0
        %v2325 = vsel %vm1025, %v1761, 0
        %v2328 = vsel %vm1025, %v1762, 0
        %v2331 = vsel %vm1025, %v1763, 0
        %v2334 = vsel %vm1025, %v1764, 0
        %2336 = vmatprep.subr.mxu0 0.0
        %2337 = vmatpush1.msra.mxu0 %v2260
        %2338 = vmatprep.subr.mxu0 0.0
        %2339 = vmatpush1.msra.mxu0 %v2259
        %2340 = vmatprep.subr.mxu0 0.0
        %2341 = vmatpush1.msra.mxu0 %v2258
        %2342 = vmatprep.subr.mxu0 0.0
        %2343 = vmatpush1.msra.mxu0 %v2257
        %2344 = vmatprep.subr.mxu0 0.0
        %2345 = vmatpush1.msra.mxu0 %v2256
        %2346 = vmatprep.subr.mxu0 0.0
        %2347 = vmatpush1.msra.mxu0 %v2255
        %2348 = vmatprep.subr.mxu0 0.0
        %2349 = vmatpush1.msra.mxu0 %v2254
        %2350 = vmatprep.subr.mxu0 0.0
        %2351 = vmatpush1.msra.mxu0 %v2253
        %2352 = vmatprep.subr.mxu0 0.0
        %2353 = vmatpush1.msra.mxu0 %v2252
        %2354 = vmatprep.subr.mxu0 0.0
        %2355 = vmatpush1.msra.mxu0 %v2251
        %2356 = vmatprep.subr.mxu0 0.0
        %2357 = vmatpush1.msra.mxu0 %v2250
        %2358 = vmatprep.subr.mxu0 0.0
        %2359 = vmatpush1.msra.mxu0 %v2249
        %2360 = vmatprep.subr.mxu0 0.0
        %2361 = vmatpush1.msra.mxu0 %v2248
        %2362 = vmatprep.subr.mxu0 0.0
        %2363 = vmatpush1.msra.mxu0 %v2247
        %2364 = vmatprep.subr.mxu0 0.0
        %2365 = vmatpush1.msra.mxu0 %v2246
        %2366 = vmatprep.subr.mxu0 0.0
        %2367 = vmatpush1.msra.mxu0 %v2245
        %2368 = vmatprep.subr.mxu0 0.0
        %2369 = vmatpush2.msra.mxu0 %v2276
        %2370 = vmatprep.subr.mxu0 0.0
        %2371 = vmatpush2.msra.mxu0 %v2275
        %2372 = vmatprep.subr.mxu0 0.0
        %2373 = vmatpush2.msra.mxu0 %v2274
        %2374 = vmatprep.subr.mxu0 0.0
        %2375 = vmatpush2.msra.mxu0 %v2273
        %2376 = vmatprep.subr.mxu0 0.0
        %2377 = vmatpush2.msra.mxu0 %v2272
        %2378 = vmatprep.subr.mxu0 0.0
        %2379 = vmatpush2.msra.mxu0 %v2271
        %2380 = vmatprep.subr.mxu0 0.0
        %2381 = vmatpush2.msra.mxu0 %v2270
        %2382 = vmatprep.subr.mxu0 0.0
        %2383 = vmatpush2.msra.mxu0 %v2269
        %2384 = vmatprep.subr.mxu0 0.0
        %2385 = vmatpush2.msra.mxu0 %v2268
        %2386 = vmatprep.subr.mxu0 0.0
        %2387 = vmatpush2.msra.mxu0 %v2267
        %2388 = vmatprep.subr.mxu0 0.0
        %2389 = vmatpush2.msra.mxu0 %v2266
        %2390 = vmatprep.subr.mxu0 0.0
        %2391 = vmatpush2.msra.mxu0 %v2265
        %2392 = vmatprep.subr.mxu0 0.0
        %2393 = vmatpush2.msra.mxu0 %v2264
        %2394 = vmatprep.subr.mxu0 0.0
        %2395 = vmatpush2.msra.mxu0 %v2263
        %2396 = vmatprep.subr.mxu0 0.0
        %2397 = vmatpush2.msra.mxu0 %v2262
        %2398 = vmatprep.subr.mxu0 0.0
        %2399 = vmatpush2.msra.mxu0 %v2261
        %2400 = vmatprep.mubr.f32.mxu0 %v2229
        %2401 = vmatmul.mubr.f32.gmra.mxu0 %v2181
        %v2402 = vpop.f32.mrf.mxu0
        %v2403 = vadd.f32 %v2286, %v2402
        %v2404 = vpop.f32.mrf.mxu0
        %2405 = vmatprep.mubr.f32.mxu0 %v2230
        %2406 = vmatmul.mubr.f32.gmra.mxu0 %v2182
        %v2407 = vpop.f32.mrf.mxu0
        %v2408 = vadd.f32 %v2286, %v2407
        %v2409 = vpop.f32.mrf.mxu0
        %2410 = vmatprep.mubr.f32.mxu0 %v2231
        %2411 = vmatmul.mubr.f32.gmra.mxu0 %v2183
        %v2412 = vpop.f32.mrf.mxu0
        %v2413 = vadd.f32 %v2286, %v2412
        %v2414 = vpop.f32.mrf.mxu0
        %2415 = vmatprep.mubr.f32.mxu0 %v2232
        %2416 = vmatmul.mubr.f32.gmra.mxu0 %v2184
        %v2417 = vpop.f32.mrf.mxu0
        %v2418 = vadd.f32 %v2286, %v2417
        %v2419 = vpop.f32.mrf.mxu0
        %2420 = vmatprep.mubr.f32.mxu0 %v2233
        %2421 = vmatmul.mubr.f32.gmra.mxu0 %v2185
        %v2422 = vpop.f32.mrf.mxu0
        %v2423 = vadd.f32 %v2286, %v2422
        %v2424 = vpop.f32.mrf.mxu0
        %2425 = vmatprep.mubr.f32.mxu0 %v2234
        %2426 = vmatmul.mubr.f32.gmra.mxu0 %v2186
        %v2427 = vpop.f32.mrf.mxu0
        %v2428 = vadd.f32 %v2286, %v2427
        %v2429 = vpop.f32.mrf.mxu0
        %2430 = vmatprep.mubr.f32.mxu0 %v2235
        %2431 = vmatmul.mubr.f32.gmra.mxu0 %v2187
        %v2432 = vpop.f32.mrf.mxu0
        %v2433 = vadd.f32 %v2286, %v2432
        %v2434 = vpop.f32.mrf.mxu0
        %2435 = vmatprep.mubr.f32.mxu0 %v2236
        %2436 = vmatmul.mubr.f32.gmra.mxu0 %v2188
        %v2437 = vpop.f32.mrf.mxu0
        %v2438 = vadd.f32 %v2286, %v2437
        %v2439 = vpop.f32.mrf.mxu0
        %2440 = vmatprep.mubr.f32.mxu0 %v2237
        %2441 = vmatmul.mubr.f32.gmra.mxu0 %v2189
        %v2442 = vpop.f32.mrf.mxu0
        %v2443 = vadd.f32 %v2286, %v2442
        %v2444 = vpop.f32.mrf.mxu0
        %2445 = vmatprep.mubr.f32.mxu0 %v2238
        %2446 = vmatmul.mubr.f32.gmra.mxu0 %v2190
        %v2447 = vpop.f32.mrf.mxu0
        %v2448 = vadd.f32 %v2286, %v2447
        %v2449 = vpop.f32.mrf.mxu0
        %2450 = vmatprep.mubr.f32.mxu0 %v2239
        %2451 = vmatmul.mubr.f32.gmra.mxu0 %v2191
        %v2452 = vpop.f32.mrf.mxu0
        %v2453 = vadd.f32 %v2286, %v2452
        %v2454 = vpop.f32.mrf.mxu0
        %2455 = vmatprep.mubr.f32.mxu0 %v2240
        %2456 = vmatmul.mubr.f32.gmra.mxu0 %v2192
        %v2457 = vpop.f32.mrf.mxu0
        %v2458 = vadd.f32 %v2286, %v2457
        %v2459 = vpop.f32.mrf.mxu0
        %2460 = vmatprep.mubr.f32.mxu0 %v2241
        %2461 = vmatmul.mubr.f32.gmra.mxu0 %v2193
        %v2462 = vpop.f32.mrf.mxu0
        %v2463 = vadd.f32 %v2286, %v2462
        %v2464 = vpop.f32.mrf.mxu0
        %2465 = vmatprep.mubr.f32.mxu0 %v2242
        %2466 = vmatmul.mubr.f32.gmra.mxu0 %v2194
        %v2467 = vpop.f32.mrf.mxu0
        %v2468 = vadd.f32 %v2286, %v2467
        %v2469 = vpop.f32.mrf.mxu0
        %2470 = vmatprep.mubr.f32.mxu0 %v2243
        %2471 = vmatmul.mubr.f32.gmra.mxu0 %v2195
        %v2472 = vpop.f32.mrf.mxu0
        %v2473 = vadd.f32 %v2286, %v2472
        %v2474 = vpop.f32.mrf.mxu0
        %2475 = vmatprep.mubr.f32.mxu0 %v2244
        %2476 = vmatmul.mubr.f32.gmra.mxu0 %v2196
        %v2477 = vpop.f32.mrf.mxu0
        %v2478 = vadd.f32 %v2286, %v2477
        %v2479 = vpop.f32.mrf.mxu0
        %2480 = vdwg.mxu0
        %2481 = vmatprep.subr.mxu0 0.0
        %2482 = vmatpush1.msra.mxu0 0.0
        %2483 = vmatprep.subr.mxu0 0.0
        %2484 = vmatpush1.msra.mxu0 0.0
        %2485 = vmatprep.subr.mxu0 0.0
        %2486 = vmatpush1.msra.mxu0 0.0
        %2487 = vmatprep.subr.mxu0 0.0
        %2488 = vmatpush1.msra.mxu0 0.0
        %2489 = vmatprep.subr.mxu0 0.0
        %2490 = vmatpush1.msra.mxu0 0.0
        %2491 = vmatprep.subr.mxu0 0.0
        %2492 = vmatpush1.msra.mxu0 0.0
        %2493 = vmatprep.subr.mxu0 0.0
        %2494 = vmatpush1.msra.mxu0 0.0
        %2495 = vmatprep.subr.mxu0 0.0
        %2496 = vmatpush1.msra.mxu0 0.0
        %2497 = vmatprep.subr.mxu0 0.0
        %2498 = vmatpush1.msra.mxu0 0.0
        %2499 = vmatprep.subr.mxu0 0.0
        %2500 = vmatpush1.msra.mxu0 0.0
        %2501 = vmatprep.subr.mxu0 0.0
        %2502 = vmatpush1.msra.mxu0 0.0
        %2503 = vmatprep.subr.mxu0 0.0
        %2504 = vmatpush1.msra.mxu0 0.0
        %2505 = vmatprep.subr.mxu0 0.0
        %2506 = vmatpush1.msra.mxu0 %v2280
        %2507 = vmatprep.subr.mxu0 0.0
        %2508 = vmatpush1.msra.mxu0 %v2279
        %2509 = vmatprep.subr.mxu0 0.0
        %2510 = vmatpush1.msra.mxu0 %v2278
        %2511 = vmatprep.subr.mxu0 0.0
        %2512 = vmatpush1.msra.mxu0 %v2277
        %2513 = vmatprep.subr.mxu0 0.0
        %2514 = vmatpush2.msra.mxu0 0.0
        %2515 = vmatprep.subr.mxu0 0.0
        %2516 = vmatpush2.msra.mxu0 0.0
        %2517 = vmatprep.subr.mxu0 0.0
        %2518 = vmatpush2.msra.mxu0 0.0
        %2519 = vmatprep.subr.mxu0 0.0
        %2520 = vmatpush2.msra.mxu0 0.0
        %2521 = vmatprep.subr.mxu0 0.0
        %2522 = vmatpush2.msra.mxu0 0.0
        %2523 = vmatprep.subr.mxu0 0.0
        %2524 = vmatpush2.msra.mxu0 0.0
        %2525 = vmatprep.subr.mxu0 0.0
        %2526 = vmatpush2.msra.mxu0 0.0
        %2527 = vmatprep.subr.mxu0 0.0
        %2528 = vmatpush2.msra.mxu0 0.0
        %2529 = vmatprep.subr.mxu0 0.0
        %2530 = vmatpush2.msra.mxu0 0.0
        %2531 = vmatprep.subr.mxu0 0.0
        %2532 = vmatpush2.msra.mxu0 0.0
        %2533 = vmatprep.subr.mxu0 0.0
        %2534 = vmatpush2.msra.mxu0 0.0
        %2535 = vmatprep.subr.mxu0 0.0
        %2536 = vmatpush2.msra.mxu0 0.0
        %2537 = vmatprep.subr.mxu0 0.0
        %2538 = vmatpush2.msra.mxu0 0.0
        %2539 = vmatprep.subr.mxu0 0.0
        %2540 = vmatpush2.msra.mxu0 0.0
        %2541 = vmatprep.subr.mxu0 0.0
        %2542 = vmatpush2.msra.mxu0 0.0
        %2543 = vmatprep.subr.mxu0 0.0
        %2544 = vmatpush2.msra.mxu0 0.0
        %2545 = vmatprep.mubr.f32.mxu0 0.0
        %2546 = vmatmul.mubr.f32.gmra.mxu0 %v2289
        %v2547 = vpop.f32.mrf.mxu0
        %v2548 = vadd.f32 %v2403, %v2547
        %v2549 = vpop.f32.mrf.mxu0
        %2550 = vmatprep.mubr.f32.mxu0 0.0
        %2551 = vmatmul.mubr.f32.gmra.mxu0 %v2292
        %v2552 = vpop.f32.mrf.mxu0
        %v2553 = vadd.f32 %v2408, %v2552
        %v2554 = vpop.f32.mrf.mxu0
        %2555 = vmatprep.mubr.f32.mxu0 0.0
        %2556 = vmatmul.mubr.f32.gmra.mxu0 %v2295
        %v2557 = vpop.f32.mrf.mxu0
        %v2558 = vadd.f32 %v2413, %v2557
        %v2559 = vpop.f32.mrf.mxu0
        %2560 = vmatprep.mubr.f32.mxu0 0.0
        %2561 = vmatmul.mubr.f32.gmra.mxu0 %v2298
        %v2562 = vpop.f32.mrf.mxu0
        %v2563 = vadd.f32 %v2418, %v2562
        %v2564 = vpop.f32.mrf.mxu0
        %2565 = vmatprep.mubr.f32.mxu0 0.0
        %2566 = vmatmul.mubr.f32.gmra.mxu0 %v2301
        %v2567 = vpop.f32.mrf.mxu0
        %v2568 = vadd.f32 %v2423, %v2567
        %v2569 = vpop.f32.mrf.mxu0
        %2570 = vmatprep.mubr.f32.mxu0 0.0
        %2571 = vmatmul.mubr.f32.gmra.mxu0 %v2304
        %v2572 = vpop.f32.mrf.mxu0
        %v2573 = vadd.f32 %v2428, %v2572
        %v2574 = vpop.f32.mrf.mxu0
        %2575 = vmatprep.mubr.f32.mxu0 0.0
        %2576 = vmatmul.mubr.f32.gmra.mxu0 %v2307
        %v2577 = vpop.f32.mrf.mxu0
        %v2578 = vadd.f32 %v2433, %v2577
        %v2579 = vpop.f32.mrf.mxu0
        %2580 = vmatprep.mubr.f32.mxu0 0.0
        %2581 = vmatmul.mubr.f32.gmra.mxu0 %v2310
        %v2582 = vpop.f32.mrf.mxu0
        %v2583 = vadd.f32 %v2438, %v2582
        %v2584 = vpop.f32.mrf.mxu0
        %2585 = vmatprep.mubr.f32.mxu0 0.0
        %2586 = vmatmul.mubr.f32.gmra.mxu0 %v2313
        %v2587 = vpop.f32.mrf.mxu0
        %v2588 = vadd.f32 %v2443, %v2587
        %v2589 = vpop.f32.mrf.mxu0
        %2590 = vmatprep.mubr.f32.mxu0 0.0
        %2591 = vmatmul.mubr.f32.gmra.mxu0 %v2316
        %v2592 = vpop.f32.mrf.mxu0
        %v2593 = vadd.f32 %v2448, %v2592
        %v2594 = vpop.f32.mrf.mxu0
        %2595 = vmatprep.mubr.f32.mxu0 0.0
        %2596 = vmatmul.mubr.f32.gmra.mxu0 %v2319
        %v2597 = vpop.f32.mrf.mxu0
        %v2598 = vadd.f32 %v2453, %v2597
        %v2599 = vpop.f32.mrf.mxu0
        %2600 = vmatprep.mubr.f32.mxu0 0.0
        %2601 = vmatmul.mubr.f32.gmra.mxu0 %v2322
        %v2602 = vpop.f32.mrf.mxu0
        %v2603 = vadd.f32 %v2458, %v2602
        %v2604 = vpop.f32.mrf.mxu0
        %2605 = vmatprep.mubr.f32.mxu0 0.0
        %2606 = vmatmul.mubr.f32.gmra.mxu0 %v2325
        %v2607 = vpop.f32.mrf.mxu0
        %v2608 = vadd.f32 %v2463, %v2607
        %v2609 = vpop.f32.mrf.mxu0
        %2610 = vmatprep.mubr.f32.mxu0 0.0
        %2611 = vmatmul.mubr.f32.gmra.mxu0 %v2328
        %v2612 = vpop.f32.mrf.mxu0
        %v2613 = vadd.f32 %v2468, %v2612
        %v2614 = vpop.f32.mrf.mxu0
        %2615 = vmatprep.mubr.f32.mxu0 0.0
        %2616 = vmatmul.mubr.f32.gmra.mxu0 %v2331
        %v2617 = vpop.f32.mrf.mxu0
        %v2618 = vadd.f32 %v2473, %v2617
        %v2619 = vpop.f32.mrf.mxu0
        %2620 = vmatprep.mubr.f32.mxu0 0.0
        %2621 = vmatmul.mubr.f32.gmra.mxu0 %v2334
        %v2622 = vpop.f32.mrf.mxu0
        %v2623 = vadd.f32 %v2478, %v2622
        %v2624 = vpop.f32.mrf.mxu0
        %2625 = vdwg.mxu0
        %v2626 = vmax.f32 %v2548, 0.0
        %v2627 = vmax.f32 %v2553, 0.0
        %v2628 = vmax.f32 %v2558, 0.0
        %v2629 = vmax.f32 %v2563, 0.0
        %v2630 = vmax.f32 %v2568, 0.0
        %v2631 = vmax.f32 %v2573, 0.0
        %v2632 = vmax.f32 %v2578, 0.0
        %v2633 = vmax.f32 %v2583, 0.0
        %v2634 = vmax.f32 %v2588, 0.0
        %v2635 = vmax.f32 %v2593, 0.0
        %v2636 = vmax.f32 %v2598, 0.0
        %v2637 = vmax.f32 %v2603, 0.0
        %v2638 = vmax.f32 %v2608, 0.0
        %v2639 = vmax.f32 %v2613, 0.0
        %v2640 = vmax.f32 %v2618, 0.0
        %v2641 = vmax.f32 %v2623, 0.0
        %s2642 = smul.u32 %s287, 16
        %s2643 = scalar_lea.vmem %s251, %s2642 [#allocation4]
        %v2644 = vld [vmem:[%s2643] sm:$0xff]
        %v2645 = vld [vmem:[%s2643 + $0x8] sm:$0xff]
        %v2646 = vld [vmem:[%s2643 + $0x10] sm:$0xff]
        %v2647 = vld [vmem:[%s2643 + $0x18] sm:$0xff]
        %v2648 = vld [vmem:[%s2643 + $0x20] sm:$0xff]
        %v2649 = vld [vmem:[%s2643 + $0x28] sm:$0xff]
        %v2650 = vld [vmem:[%s2643 + $0x30] sm:$0xff]
        %v2651 = vld [vmem:[%s2643 + $0x38] sm:$0xff]
        %v2652 = vld [vmem:[%s2643 + $0x40] sm:$0xff]
        %v2653 = vld [vmem:[%s2643 + $0x48] sm:$0xff]
        %v2654 = vld [vmem:[%s2643 + $0x50] sm:$0xff]
        %v2655 = vld [vmem:[%s2643 + $0x58] sm:$0xff]
        %v2656 = vld [vmem:[%s2643 + $0x60] sm:$0xff]
        %v2657 = vld [vmem:[%s2643 + $0x68] sm:$0xff]
        %v2658 = vld [vmem:[%s2643 + $0x70] sm:$0xff]
        %v2659 = vld [vmem:[%s2643 + $0x78] sm:$0xff]
        %v2660 = vadd.f32 %v2626, %v2644
        %v2661 = vadd.f32 %v2627, %v2645
        %v2662 = vadd.f32 %v2628, %v2646
        %v2663 = vadd.f32 %v2629, %v2647
        %v2664 = vadd.f32 %v2630, %v2648
        %v2665 = vadd.f32 %v2631, %v2649
        %v2666 = vadd.f32 %v2632, %v2650
        %v2667 = vadd.f32 %v2633, %v2651
        %v2668 = vadd.f32 %v2634, %v2652
        %v2669 = vadd.f32 %v2635, %v2653
        %v2670 = vadd.f32 %v2636, %v2654
        %v2671 = vadd.f32 %v2637, %v2655
        %v2672 = vadd.f32 %v2638, %v2656
        %v2673 = vadd.f32 %v2639, %v2657
        %v2674 = vadd.f32 %v2640, %v2658
        %v2675 = vadd.f32 %v2641, %v2659
        %2676 = vst.msk [vmem:[%s285] sm:$0xff] %vm1025, %v2660
        %2677 = vst.msk [vmem:[%s285 + $0x8] sm:$0xff] %vm1025, %v2661
        %2678 = vst.msk [vmem:[%s285 + $0x10] sm:$0xff] %vm1025, %v2662
        %2679 = vst.msk [vmem:[%s285 + $0x18] sm:$0xff] %vm1025, %v2663
        %2680 = vst.msk [vmem:[%s285 + $0x20] sm:$0xff] %vm1025, %v2664
        %2681 = vst.msk [vmem:[%s285 + $0x28] sm:$0xff] %vm1025, %v2665
        %2682 = vst.msk [vmem:[%s285 + $0x30] sm:$0xff] %vm1025, %v2666
        %2683 = vst.msk [vmem:[%s285 + $0x38] sm:$0xff] %vm1025, %v2667
        %2684 = vst.msk [vmem:[%s285 + $0x40] sm:$0xff] %vm1025, %v2668
        %2685 = vst.msk [vmem:[%s285 + $0x48] sm:$0xff] %vm1025, %v2669
        %2686 = vst.msk [vmem:[%s285 + $0x50] sm:$0xff] %vm1025, %v2670
        %2687 = vst.msk [vmem:[%s285 + $0x58] sm:$0xff] %vm1025, %v2671
        %2688 = vst.msk [vmem:[%s285 + $0x60] sm:$0xff] %vm1025, %v2672
        %2689 = vst.msk [vmem:[%s285 + $0x68] sm:$0xff] %vm1025, %v2673
        %2690 = vst.msk [vmem:[%s285 + $0x70] sm:$0xff] %vm1025, %v2674
        %2691 = vst.msk [vmem:[%s285 + $0x78] sm:$0xff] %vm1025, %v2675
        %s2692 = sand.u32 %s155, 1
        %s2693 = scalar_lea.sflag [#allocation6], %s2692
        %s2694 = sand.u32 %s155, 1
        %s2695 = smul.addr %s2694, 128
        %s2696 = scalar_lea.vmem [#allocation10], %s2695
        // Predicated region
        $region65: #{basic_conv_nchw.1} parent=39 // pred_check
          %p2697 = pneg %p165
        $region66: #{basic_conv_nchw.1} parent=39 // pred_check_branch
          %2699 = sbr.rel (%p2697) target = $region68
        $region67: #{basic_conv_nchw.1} parent=39 // pred_region
          %s2700 = smul.u32 8, %s28
          %s2702 = ssub.s32 2048, 2048
          %2703 = vsyncadd %s2693, %s2702
          %s2704 = smul.addr %s2700, 2
          %s2705 = smul.addr %s27, 32
          %s2706 = sadd.s32 %s2704, %s2705
          %s2707 = smul.addr %s2706, 128
          %s2708 = scalar_lea.hbm %s5, %s2707
          %s2709 = sshll.u32 %s2696, 4
          %s2710 = int_to_ptr.vmem [resolvable:$true] %s2709
          %2715 = dma.vmem_to_hbm [thread:$0]  %s2710, 2048, %s2708, %s2693, 128, 128, 8
        $region68: #{basic_conv_nchw.1} parent=39 // pred_fallthru
          _
      $region40: #{basic_conv_nchw.1} parent=5 // pred_fallthru
        _
      %p2716 = scmp.le.s32.totalorder 2, %s18
      // Predicated region
      $region69: #{basic_conv_nchw.1} parent=5 // pred_check
        %p2717 = pneg %p2716
      $region70: #{basic_conv_nchw.1} parent=5 // pred_check_branch
        %2719 = sbr.rel (%p2717) target = $region72
      $region71: #{basic_conv_nchw.1} parent=5 // pred_region
        %s2720 = ssub.s32 %s18, 2
        // Predicated region
        $region73: #{basic_conv_nchw.1} parent=71 // pred_check
          %p2721 = pneg %p171
        $region74: #{basic_conv_nchw.1} parent=71 // pred_check_branch
          %2723 = sbr.rel (%p2721) target = $region76
        $region75: #{basic_conv_nchw.1} parent=71 // pred_region
          %s2724 = sand.u32 %s156, 1
          %s2725 = scalar_lea.sflag [#allocation6], %s2724
          %s2726 = sand.u32 %s156, 1
          %s2727 = smul.addr %s2726, 128
          %s2728 = scalar_lea.vmem [#allocation10], %s2727
          %2729 = dma.done %s2725, 2048
        $region76: #{basic_conv_nchw.1} parent=71 // pred_fallthru
          _
      $region72: #{basic_conv_nchw.1} parent=5 // pred_fallthru
        _
    $region6: #{basic_conv_nchw.1} parent=1 // loop_footer
      %s22 = sadd.s32 1, %s18
    $region7: #{basic_conv_nchw.1} parent=1 // loop_footer_branch
      %17 = sbr.rel target = $region3
    $region8: #{basic_conv_nchw.1} parent=1 // loop_exit
      _
    %2730 = vsyncpa [#allocation5], 1
    %s2731 = scalar_lea.sflag [#allocation5], 1
    %2732 = vsyncpa %s2731, 1
    %2733 = vsyncpa [#allocation8], 1
    %2734 = vsyncpa [#allocation6], 1
    %s2735 = scalar_lea.sflag [#allocation6], 1
    %2736 = vsyncpa %s2735, 1

</llo_original>
